<compile_context>
chip_gen: v6e
topology: v6e:2x2x1
jax: 0.10.0
libtpu: 0.0.40
codegen_flags: <defaults>
</compile_context>

<pallas_src>
import functools

import jax
import jax.numpy as jnp
from jax.experimental import pallas as pl
from jax.experimental.pallas import tpu as pltpu


# ---------------------------------------------------------------------------
# Flash-attention core (projections & output dense are hoisted to the wrapper)
# ---------------------------------------------------------------------------
def _mha_flash_kernel(*refs, n_heads, att_size, has_mask):
    if has_mask:
        qp_ref, kp_ref, vp_ref, mask_ref, o_ref, m_ref, l_ref, acc_ref = refs
    else:
        qp_ref, kp_ref, vp_ref, o_ref, m_ref, l_ref, acc_ref = refs
        mask_ref = None

    ki = pl.program_id(2)
    nk = pl.num_programs(2)
    cdt = qp_ref.dtype            # MXU input dtype (bf16 stays bf16, f32 stays f32)

    @pl.when(ki == 0)
    def _init():
        m_ref[...] = jnp.full(m_ref.shape, -jnp.inf, dtype=m_ref.dtype)
        l_ref[...] = jnp.zeros(l_ref.shape, dtype=l_ref.dtype)
        acc_ref[...] = jnp.zeros(acc_ref.shape, dtype=acc_ref.dtype)

    # Scores for all heads at once (head-batched MXU matmul, f32 accumulation).
    s = jnp.einsum('hqd,hkd->hqk', qp_ref[...], kp_ref[...],
                   preferred_element_type=jnp.float32)            # (H, tq, tk)
    if mask_ref is not None:
        s = s + mask_ref[...][None].astype(jnp.float32)           # bcast over heads

    # Online softmax update (all f32: required on v5e, cheap everywhere).
    m_prev = m_ref[...]
    m_new = jnp.maximum(m_prev, jnp.max(s, axis=-1, keepdims=True))
    alpha = jnp.exp(m_prev - m_new)
    p = jnp.exp(s - m_new)
    l_ref[...] = alpha * l_ref[...] + jnp.sum(p, axis=-1, keepdims=True)
    acc_ref[...] = alpha * acc_ref[...] + jnp.einsum(
        'hqk,hkd->hqd', p.astype(cdt), vp_ref[...],
        preferred_element_type=jnp.float32)
    m_ref[...] = m_new

    @pl.when(ki == nk - 1)
    def _finalize():
        # Normalize and emit lane-dense (tq, H*d) == (tq, D): exactly torch's
        # transpose(1,2).reshape(B,-1,H*d) layout, so the dense projection can
        # run as a single full-depth matmul in the wrapper.
        z = acc_ref[...] * pl.reciprocal(l_ref[...], approx=True)   # (H, tq, d)
        d = att_size
        for h in range(n_heads):        # static, epilogue-only slice stores
            o_ref[:, h * d:(h + 1) * d] = z[h].astype(o_ref.dtype)


def _pick_tile(seq_len, target=256):
    """Largest tile <= target dividing S that keeps (8,128) tiling legal.

    target=256 (not 512) keeps per-step buffers comfortably inside v7x's
    64 MiB per-TC VMEM while staying near the HBM roofline on v5e/v6e.
    """
    if seq_len <= target:
        return seq_len
    if seq_len % 128 != 0:
        # TODO(synk): pad S to a multiple of 128 instead of a full-S fallback
        # for very long, non-aligned sequences (mask block becomes (S, S)).
        return seq_len
    t = (target // 128) * 128
    while t >= 128:
        if seq_len % t == 0:
            return t
        t -= 128
    return seq_len


def _tile_vmem_bytes(shape, dtype):
    """Approximate VMEM footprint of one buffer, incl. (sublane, lane) padding."""
    itemsize = jnp.dtype(dtype).itemsize
    dims = list(shape)
    dims[-1] = -(-dims[-1] // 128) * 128
    if len(dims) >= 2:
        sub = {4: 8, 2: 16, 1: 32}.get(itemsize, 8)
        dims[-2] = -(-dims[-2] // sub) * sub
    n = 1
    for x in dims:
        n *= x
    return n * itemsize


def multi_head_attention(q, k, v, time_lengths, mask, wq, wk, wv, wd, *,
                         n_heads, q_tile=None, kv_tile=None,
                         compute_dtype=None, mask_dtype=jnp.bfloat16):
    """Forward pass of the bert4rec MultiHeadAttention module (eval mode)."""
    del time_lengths                      # accepted but unused by torch forward()
    B, S, D = q.shape
    H = n_heads
    assert D % H == 0
    d = D // H
    scale = 1.0 / float(d) ** 0.5
    out_dtype = q.dtype
    cdt = out_dtype if compute_dtype is None else compute_dtype

    # ---- full-depth projections, hoisted out of the flash loop (plain XLA) ---
    # One (B*S, D) x (D, D) matmul per projection -> full MXU width; head-major
    # (B, H, S, d) result streamed into the kernel.  Scale folded into Wq.
    def _project(x, w):
        y = jnp.einsum('bsd,ed->bse', x, w, preferred_element_type=jnp.float32)
        return y.reshape(B, S, H, d).transpose(0, 2, 1, 3).astype(cdt)

    qp = _project(q, wq * scale)
    kp = _project(k, wk)
    vp = _project(v, wv)

    has_mask = mask is not None
    if has_mask:
        assert mask.shape[-2:] == (S, S) and mask.shape[1] == 1
        mask2 = mask[:, 0]                      # (Bm, S, S), head dim squeezed
        if mask_dtype is not None:
            mask2 = mask2.astype(mask_dtype)    # bf16 stream: half the traffic

    tq = q_tile if q_tile is not None else _pick_tile(S)
    tk = kv_tile if kv_tile is not None else _pick_tile(S)
    assert S % tq == 0 and S % tk == 0
    nq, nk = S // tq, S // tk

    in_specs = [
        pl.BlockSpec((pl.Squeezed(), H, tq, d), lambda b, qi, ki: (b, 0, qi, 0)),  # Qp
        pl.BlockSpec((pl.Squeezed(), H, tk, d), lambda b, qi, ki: (b, 0, ki, 0)),  # Kp
        pl.BlockSpec((pl.Squeezed(), H, tk, d), lambda b, qi, ki: (b, 0, ki, 0)),  # Vp
    ]
    inputs = [qp, kp, vp]
    if has_mask:
        if mask2.shape[0] == 1:                 # batch-shared mask: stream once
            mask_idx = lambda b, qi, ki: (0, qi, ki)
        else:
            mask_idx = lambda b, qi, ki: (b, qi, ki)
        in_specs.append(pl.BlockSpec((pl.Squeezed(), tq, tk), mask_idx))
        inputs.append(mask2)

    # VMEM budget derived from actual (padded) buffer sizes; fits v7x's 64 MiB.
    est = 2 * (_tile_vmem_bytes((H, tq, d), cdt)
               + 2 * _tile_vmem_bytes((H, tk, d), cdt)
               + _tile_vmem_bytes((tq, D), cdt))
    if has_mask:
        est += 2 * _tile_vmem_bytes((tq, tk), mask2.dtype)
    est += 2 * _tile_vmem_bytes((H, tq, 1), jnp.float32)       # m, l scratch
    est += _tile_vmem_bytes((H, tq, d), jnp.float32)           # acc scratch
    est += 2 * _tile_vmem_bytes((H, tq, tk), jnp.float32)      # s / p temporaries
    vmem_limit = int(min(64 * 1024 * 1024, max(32 * 1024 * 1024, 2 * est)))

    kernel = functools.partial(_mha_flash_kernel, n_heads=H, att_size=d,
                               has_mask=has_mask)

    # TODO(synk): for causal/banded masks, a scalar-prefetch kv-extent table
    # (num_scalar_prefetch > 0) could skip fully-masked kv steps (~2x); the
    # module's mask is arbitrary, so it is not assumed here.
    z = pl.pallas_call(
        kernel,
        out_shape=jax.ShapeDtypeStruct((B, S, D), cdt),
        grid_spec=pltpu.PrefetchScalarGridSpec(
            num_scalar_prefetch=0,
            grid=(B, nq, nk),
            in_specs=in_specs,
            out_specs=pl.BlockSpec((pl.Squeezed(), tq, D),
                                   lambda b, qi, ki: (b, qi, 0)),
            scratch_shapes=[
                pltpu.VMEM((H, tq, 1), jnp.float32),    # running max  m
                pltpu.VMEM((H, tq, 1), jnp.float32),    # running sum  l
                pltpu.VMEM((H, tq, d), jnp.float32),    # output accumulator
            ],
        ),
        compiler_params=pltpu.CompilerParams(
            # TODO(synk): on v7x, pltpu.CORE_PARALLEL on the batch axis would
            # shard across the 2 TensorCores; kept portable across v5e/v6e here.
            dimension_semantics=("parallel", "parallel", "arbitrary"),
            vmem_limit_bytes=vmem_limit,
        ),
    )(*inputs)

    # ---- final dense projection: ONE full-depth (K = H*d = D) XLA matmul ----
    out = jnp.einsum('bsi,oi->bso', z, wd.astype(cdt),
                     preferred_element_type=jnp.float32)
    # TODO(synk): dropout applied as identity (eval mode / p = 0).
    return out.astype(out_dtype)


def _reference(q, k, v, mask, wq, wk, wv, wd, n_heads):
    B, S, D = q.shape
    d = D // n_heads

    def proj(x, w):
        y = jnp.einsum("bsd,ed->bse", x, w)                    # bias-free Linear
        return y.reshape(B, S, n_heads, d).transpose(0, 2, 1, 3)

    Q, K, V = proj(q, wq), proj(k, wk), proj(v, wv)
    s = jnp.einsum("bhqd,bhkd->bhqk", Q, K) / (d ** 0.5)
    if mask is not None:
        s = s + mask
    p = jax.nn.softmax(s, axis=-1)
    z = jnp.einsum("bhqk,bhkd->bhqd", p, V)
    z = z.transpose(0, 2, 1, 3).reshape(B, S, D)
    return jnp.einsum("bsd,ed->bse", z, wd)


if __name__ == "__main__":
    # --- config 1: small shapes implied by the module (dim=32, n_heads=4) ---
    B, S, D, H = 2, 8, 32, 4
    key = jax.random.PRNGKey(0)
    kq, kk, kv_, kwq, kwk, kwv, kwd = jax.random.split(key, 7)

    q = jax.random.normal(kq, (B, S, D), dtype=jnp.float32)
    k = jax.random.normal(kk, (B, S, D), dtype=jnp.float32)
    v = jax.random.normal(kv_, (B, S, D), dtype=jnp.float32)
    time_lengths = jnp.full((B,), S, dtype=jnp.int32)          # unused by forward()

    wq = jax.random.normal(kwq, (D, D), dtype=jnp.float32) * 0.05
    wk = jax.random.normal(kwk, (D, D), dtype=jnp.float32) * 0.05
    wv = jax.random.normal(kwv, (D, D), dtype=jnp.float32) * 0.05
    wd = jax.random.normal(kwd, (D, D), dtype=jnp.float32) * 0.05

    causal = jnp.tril(jnp.ones((S, S), dtype=jnp.float32))
    mask = jnp.where(causal[None, None] > 0, 0.0, -1e9).astype(jnp.float32)
    mask = jnp.broadcast_to(mask, (B, 1, S, S))

    out = multi_head_attention(q, k, v, time_lengths, mask,
                               wq, wk, wv, wd, n_heads=H)
    out = jax.block_until_ready(out)
    ref = _reference(q, k, v, mask, wq, wk, wv, wd, H)
    assert out.shape == (B, S, D)
    assert jnp.allclose(out, ref, atol=2e-3, rtol=2e-3), "mismatch (small, masked)"

    # no-mask path
    out_nm = multi_head_attention(q, k, v, time_lengths, None,
                                  wq, wk, wv, wd, n_heads=H)
    out_nm = jax.block_until_ready(out_nm)
    ref_nm = _reference(q, k, v, None, wq, wk, wv, wd, H)
    assert jnp.allclose(out_nm, ref_nm, atol=2e-3, rtol=2e-3), "mismatch (no mask)"

    # --- config 2: exercises the tiled / online-softmax path (grid 2x2x2) ---
    B2, S2, D2, H2 = 2, 256, 128, 4
    key2 = jax.random.PRNGKey(1)
    kq, kk, kv_, kwq, kwk, kwv, kwd = jax.random.split(key2, 7)
    q2 = jax.random.normal(kq, (B2, S2, D2), dtype=jnp.float32)
    k2 = jax.random.normal(kk, (B2, S2, D2), dtype=jnp.float32)
    v2 = jax.random.normal(kv_, (B2, S2, D2), dtype=jnp.float32)
    wq2 = jax.random.normal(kwq, (D2, D2), dtype=jnp.float32) * 0.05
    wk2 = jax.random.normal(kwk, (D2, D2), dtype=jnp.float32) * 0.05
    wv2 = jax.random.normal(kwv, (D2, D2), dtype=jnp.float32) * 0.05
    wd2 = jax.random.normal(kwd, (D2, D2), dtype=jnp.float32) * 0.05
    causal2 = jnp.tril(jnp.ones((S2, S2), dtype=jnp.float32))
    mask2 = jnp.where(causal2[None, None] > 0, 0.0, -1e9).astype(jnp.float32)  # (1,1,S,S)
    tl2 = jnp.full((B2,), S2, jnp.int32)

    out2 = multi_head_attention(q2, k2, v2, tl2, mask2,
                                wq2, wk2, wv2, wd2, n_heads=H2,
                                q_tile=128, kv_tile=128)
    out2 = jax.block_until_ready(out2)
    ref2 = _reference(q2, k2, v2, mask2, wq2, wk2, wv2, wd2, H2)
    assert jnp.allclose(out2, ref2, atol=5e-3, rtol=5e-3), "mismatch (tiled f32)"

    # --- config 3: bf16 MXU inputs with f32 accumulation (review item 6) ---
    out3 = multi_head_attention(q2, k2, v2, tl2, mask2,
                                wq2, wk2, wv2, wd2, n_heads=H2,
                                q_tile=128, kv_tile=128,
                                compute_dtype=jnp.bfloat16)
    out3 = jax.block_until_ready(out3)
    assert jnp.allclose(out3, ref2, atol=2e-2, rtol=2e-2), "mismatch (bf16 compute)"

    print("KERNEL_OK")
</pallas_src>

<mosaic_0001>
module attributes {stable_mosaic.version = 11 : i64} {
  func.func @_mha_flash_kernel(%arg0: i32, %arg1: i32, %arg2: i32, %arg3: memref<1x4x8x8xf32, #tpu.memory_space<vmem>>, %arg4: memref<1x4x8x8xf32, #tpu.memory_space<vmem>>, %arg5: memref<1x4x8x8xf32, #tpu.memory_space<vmem>>, %arg6: memref<1x8x8xbf16, #tpu.memory_space<vmem>>, %arg7: memref<1x8x32xf32, #tpu.memory_space<vmem>>, %arg8: memref<4x8x1xf32, #tpu.memory_space<vmem>>, %arg9: memref<4x8x1xf32, #tpu.memory_space<vmem>>, %arg10: memref<4x8x8xf32, #tpu.memory_space<vmem>>) attributes {dimension_semantics = [#tpu.dimension_semantics<parallel>, #tpu.dimension_semantics<parallel>, #tpu.dimension_semantics<arbitrary>], iteration_bounds = array<i64: 2, 1, 1>, scalar_prefetch = 0 : i64, scratch_operands = 3 : i64, tpu.core_type = #tpu.core_type<tc>, window_params = [{transform_indices = @transform_0, window_bounds = array<i64: 1, 4, 8, 8>}, {transform_indices = @transform_1, window_bounds = array<i64: 1, 4, 8, 8>}, {transform_indices = @transform_2, window_bounds = array<i64: 1, 4, 8, 8>}, {transform_indices = @transform_3, window_bounds = array<i64: 1, 8, 8>}, {transform_indices = @transform_4, window_bounds = array<i64: 1, 8, 32>}]} {
    %c0_i32 = arith.constant 0 : i32
    %0 = arith.cmpi eq, %arg2, %c0_i32 : i32
    %1 = arith.extui %0 : i1 to i32
    %c0_i32_0 = arith.constant 0 : i32
    %2 = arith.cmpi ne, %1, %c0_i32_0 : i32
    scf.if %2 {
      %cst_38 = arith.constant 0xFF800000 : f32
      %41 = vector.broadcast %cst_38 : f32 to vector<4x8x1xf32>
      %c0_39 = arith.constant 0 : index
      %c0_40 = arith.constant 0 : index
      %c0_41 = arith.constant 0 : index
      %42 = vector.load %arg8[%c0_39, %c0_40, %c0_41] : memref<4x8x1xf32, #tpu.memory_space<vmem>>, vector<4x8x1xf32>
      tpu.vector_store %arg8[%c0_39, %c0_40, %c0_41], %41 {strides = array<i32>} : memref<4x8x1xf32, #tpu.memory_space<vmem>>, vector<4x8x1xf32>,
      %cst_42 = arith.constant 0.000000e+00 : f32
      %43 = vector.broadcast %cst_42 : f32 to vector<4x8x1xf32>
      %c0_43 = arith.constant 0 : index
      %c0_44 = arith.constant 0 : index
      %c0_45 = arith.constant 0 : index
      %44 = vector.load %arg9[%c0_43, %c0_44, %c0_45] : memref<4x8x1xf32, #tpu.memory_space<vmem>>, vector<4x8x1xf32>
      tpu.vector_store %arg9[%c0_43, %c0_44, %c0_45], %43 {strides = array<i32>} : memref<4x8x1xf32, #tpu.memory_space<vmem>>, vector<4x8x1xf32>,
      %cst_46 = arith.constant 0.000000e+00 : f32
      %45 = vector.broadcast %cst_46 : f32 to vector<4x8x8xf32>
      %c0_47 = arith.constant 0 : index
      %c0_48 = arith.constant 0 : index
      %c0_49 = arith.constant 0 : index
      %46 = vector.load %arg10[%c0_47, %c0_48, %c0_49] : memref<4x8x8xf32, #tpu.memory_space<vmem>>, vector<4x8x8xf32>
      tpu.vector_store %arg10[%c0_47, %c0_48, %c0_49], %45 {strides = array<i32>} : memref<4x8x8xf32, #tpu.memory_space<vmem>>, vector<4x8x8xf32>,
    } else {
    }
    %c0 = arith.constant 0 : index
    %c0_1 = arith.constant 0 : index
    %c0_2 = arith.constant 0 : index
    %c0_3 = arith.constant 0 : index
    %3 = vector.load %arg3[%c0, %c0_1, %c0_2, %c0_3] : memref<1x4x8x8xf32, #tpu.memory_space<vmem>>, vector<1x4x8x8xf32>
    %4 = vector.shape_cast %3 : vector<1x4x8x8xf32> to vector<4x8x8xf32>
    %c0_4 = arith.constant 0 : index
    %c0_5 = arith.constant 0 : index
    %c0_6 = arith.constant 0 : index
    %c0_7 = arith.constant 0 : index
    %5 = vector.load %arg4[%c0_4, %c0_5, %c0_6, %c0_7] : memref<1x4x8x8xf32, #tpu.memory_space<vmem>>, vector<1x4x8x8xf32>
    %6 = vector.shape_cast %5 : vector<1x4x8x8xf32> to vector<4x8x8xf32>
    "tpu.trace_start"() <{level = 10 : i32, message = "hqd,hkd->hqk"}> : () -> ()
    %cst = arith.constant dense<0.000000e+00> : vector<4x8x8xf32>
    %7 = tpu.matmul %4, %6, %cst {dimension_numbers = #tpu.dot_dimension_numbers<[2], [2], [1], [1], [0, 0, 0, 1, 1, 1], [0], [0]>} : vector<4x8x8xf32>, vector<4x8x8xf32>, vector<4x8x8xf32> -> vector<4x8x8xf32>
    "tpu.trace_stop"() : () -> ()
    %c0_8 = arith.constant 0 : index
    %c0_9 = arith.constant 0 : index
    %c0_10 = arith.constant 0 : index
    %8 = vector.load %arg6[%c0_8, %c0_9, %c0_10] : memref<1x8x8xbf16, #tpu.memory_space<vmem>>, vector<1x8x8xbf16>
    %9 = vector.shape_cast %8 : vector<1x8x8xbf16> to vector<8x8xbf16>
    %10 = vector.shape_cast %9 : vector<8x8xbf16> to vector<1x8x8xbf16>
    %11 = arith.extf %10 : vector<1x8x8xbf16> to vector<1x8x8xf32>
    %12 = vector.broadcast %11 : vector<1x8x8xf32> to vector<4x8x8xf32>
    %13 = arith.addf %7, %12 : vector<4x8x8xf32>
    %c0_11 = arith.constant 0 : index
    %c0_12 = arith.constant 0 : index
    %c0_13 = arith.constant 0 : index
    %14 = vector.load %arg8[%c0_11, %c0_12, %c0_13] : memref<4x8x1xf32, #tpu.memory_space<vmem>>, vector<4x8x1xf32>
    %cst_14 = arith.constant dense<0xFF800000> : vector<4x8xf32>
    %15 = vector.multi_reduction <maximumf>, %13, %cst_14 [2] : vector<4x8x8xf32> to vector<4x8xf32>
    %16 = vector.shape_cast %15 : vector<4x8xf32> to vector<4x8x1xf32>
    %17 = arith.maximumf %14, %16 : vector<4x8x1xf32>
    %18 = arith.subf %14, %17 : vector<4x8x1xf32>
    %19 = math.exp %18 : vector<4x8x1xf32>
    %20 = vector.broadcast %17 : vector<4x8x1xf32> to vector<4x8x8xf32>
    %21 = arith.subf %13, %20 : vector<4x8x8xf32>
    %22 = math.exp %21 : vector<4x8x8xf32>
    %c0_15 = arith.constant 0 : index
    %c0_16 = arith.constant 0 : index
    %c0_17 = arith.constant 0 : index
    %23 = vector.load %arg9[%c0_15, %c0_16, %c0_17] : memref<4x8x1xf32, #tpu.memory_space<vmem>>, vector<4x8x1xf32>
    %24 = arith.mulf %19, %23 : vector<4x8x1xf32>
    %cst_18 = arith.constant dense<0.000000e+00> : vector<4x8xf32>
    %25 = vector.multi_reduction <add>, %22, %cst_18 [2] : vector<4x8x8xf32> to vector<4x8xf32>
    %26 = vector.shape_cast %25 : vector<4x8xf32> to vector<4x8x1xf32>
    %27 = arith.addf %24, %26 : vector<4x8x1xf32>
    %c0_19 = arith.constant 0 : index
    %c0_20 = arith.constant 0 : index
    %c0_21 = arith.constant 0 : index
    %28 = vector.load %arg9[%c0_19, %c0_20, %c0_21] : memref<4x8x1xf32, #tpu.memory_space<vmem>>, vector<4x8x1xf32>
    tpu.vector_store %arg9[%c0_19, %c0_20, %c0_21], %27 {strides = array<i32>} : memref<4x8x1xf32, #tpu.memory_space<vmem>>, vector<4x8x1xf32>,
    %c0_22 = arith.constant 0 : index
    %c0_23 = arith.constant 0 : index
    %c0_24 = arith.constant 0 : index
    %29 = vector.load %arg10[%c0_22, %c0_23, %c0_24] : memref<4x8x8xf32, #tpu.memory_space<vmem>>, vector<4x8x8xf32>
    %30 = vector.broadcast %19 : vector<4x8x1xf32> to vector<4x8x8xf32>
    %31 = arith.mulf %30, %29 : vector<4x8x8xf32>
    %c0_25 = arith.constant 0 : index
    %c0_26 = arith.constant 0 : index
    %c0_27 = arith.constant 0 : index
    %c0_28 = arith.constant 0 : index
    %32 = vector.load %arg5[%c0_25, %c0_26, %c0_27, %c0_28] : memref<1x4x8x8xf32, #tpu.memory_space<vmem>>, vector<1x4x8x8xf32>
    %33 = vector.shape_cast %32 : vector<1x4x8x8xf32> to vector<4x8x8xf32>
    "tpu.trace_start"() <{level = 10 : i32, message = "hqk,hkd->hqd"}> : () -> ()
    %cst_29 = arith.constant dense<0.000000e+00> : vector<4x8x8xf32>
    %34 = tpu.matmul %22, %33, %cst_29 {dimension_numbers = #tpu.dot_dimension_numbers<[2], [1], [1], [2], [0, 0, 0, 1, 1, 2], [0], [0]>} : vector<4x8x8xf32>, vector<4x8x8xf32>, vector<4x8x8xf32> -> vector<4x8x8xf32>
    "tpu.trace_stop"() : () -> ()
    %35 = arith.addf %31, %34 : vector<4x8x8xf32>
    %c0_30 = arith.constant 0 : index
    %c0_31 = arith.constant 0 : index
    %c0_32 = arith.constant 0 : index
    %36 = vector.load %arg10[%c0_30, %c0_31, %c0_32] : memref<4x8x8xf32, #tpu.memory_space<vmem>>, vector<4x8x8xf32>
    tpu.vector_store %arg10[%c0_30, %c0_31, %c0_32], %35 {strides = array<i32>} : memref<4x8x8xf32, #tpu.memory_space<vmem>>, vector<4x8x8xf32>,
    %c0_33 = arith.constant 0 : index
    %c0_34 = arith.constant 0 : index
    %c0_35 = arith.constant 0 : index
    %37 = vector.load %arg8[%c0_33, %c0_34, %c0_35] : memref<4x8x1xf32, #tpu.memory_space<vmem>>, vector<4x8x1xf32>
    tpu.vector_store %arg8[%c0_33, %c0_34, %c0_35], %17 {strides = array<i32>} : memref<4x8x1xf32, #tpu.memory_space<vmem>>, vector<4x8x1xf32>,
    %c0_i32_36 = arith.constant 0 : i32
    %38 = arith.cmpi eq, %arg2, %c0_i32_36 : i32
    %39 = arith.extui %38 : i1 to i32
    %c0_i32_37 = arith.constant 0 : i32
    %40 = arith.cmpi ne, %39, %c0_i32_37 : i32
    scf.if %40 {
      %c0_38 = arith.constant 0 : index
      %c0_39 = arith.constant 0 : index
      %c0_40 = arith.constant 0 : index
      %41 = vector.load %arg10[%c0_38, %c0_39, %c0_40] : memref<4x8x8xf32, #tpu.memory_space<vmem>>, vector<4x8x8xf32>
      %c0_41 = arith.constant 0 : index
      %c0_42 = arith.constant 0 : index
      %c0_43 = arith.constant 0 : index
      %42 = vector.load %arg9[%c0_41, %c0_42, %c0_43] : memref<4x8x1xf32, #tpu.memory_space<vmem>>, vector<4x8x1xf32>
      %43 = tpu.reciprocal %42 {approx = true} : vector<4x8x1xf32> -> vector<4x8x1xf32>
      %44 = vector.broadcast %43 : vector<4x8x1xf32> to vector<4x8x8xf32>
      %45 = arith.mulf %41, %44 : vector<4x8x8xf32>
      %46 = vector.extract_strided_slice %45 {offsets = [0, 0, 0], sizes = [1, 8, 8], strides = [1, 1, 1]} : vector<4x8x8xf32> to vector<1x8x8xf32>
      %47 = vector.shape_cast %46 : vector<1x8x8xf32> to vector<8x8xf32>
      %c0_44 = arith.constant 0 : index
      %c0_45 = arith.constant 0 : index
      %c0_46 = arith.constant 0 : index
      %48 = vector.load %arg7[%c0_44, %c0_45, %c0_46] : memref<1x8x32xf32, #tpu.memory_space<vmem>>, vector<1x8x8xf32>
      %49 = vector.shape_cast %48 : vector<1x8x8xf32> to vector<8x8xf32>
      %50 = vector.shape_cast %47 : vector<8x8xf32> to vector<1x8x8xf32>
      tpu.vector_store %arg7[%c0_44, %c0_45, %c0_46], %50 {strides = array<i32>} : memref<1x8x32xf32, #tpu.memory_space<vmem>>, vector<1x8x8xf32>,
      %51 = vector.extract_strided_slice %45 {offsets = [1, 0, 0], sizes = [1, 8, 8], strides = [1, 1, 1]} : vector<4x8x8xf32> to vector<1x8x8xf32>
      %52 = vector.shape_cast %51 : vector<1x8x8xf32> to vector<8x8xf32>
      %c0_47 = arith.constant 0 : index
      %c0_48 = arith.constant 0 : index
      %c8 = arith.constant 8 : index
      %53 = vector.load %arg7[%c0_47, %c0_48, %c8] : memref<1x8x32xf32, #tpu.memory_space<vmem>>, vector<1x8x8xf32>
      %54 = vector.shape_cast %53 : vector<1x8x8xf32> to vector<8x8xf32>
      %55 = vector.shape_cast %52 : vector<8x8xf32> to vector<1x8x8xf32>
      tpu.vector_store %arg7[%c0_47, %c0_48, %c8], %55 {strides = array<i32>} : memref<1x8x32xf32, #tpu.memory_space<vmem>>, vector<1x8x8xf32>,
      %56 = vector.extract_strided_slice %45 {offsets = [2, 0, 0], sizes = [1, 8, 8], strides = [1, 1, 1]} : vector<4x8x8xf32> to vector<1x8x8xf32>
      %57 = vector.shape_cast %56 : vector<1x8x8xf32> to vector<8x8xf32>
      %c0_49 = arith.constant 0 : index
      %c0_50 = arith.constant 0 : index
      %c16 = arith.constant 16 : index
      %58 = vector.load %arg7[%c0_49, %c0_50, %c16] : memref<1x8x32xf32, #tpu.memory_space<vmem>>, vector<1x8x8xf32>
      %59 = vector.shape_cast %58 : vector<1x8x8xf32> to vector<8x8xf32>
      %60 = vector.shape_cast %57 : vector<8x8xf32> to vector<1x8x8xf32>
      tpu.vector_store %arg7[%c0_49, %c0_50, %c16], %60 {strides = array<i32>} : memref<1x8x32xf32, #tpu.memory_space<vmem>>, vector<1x8x8xf32>,
      %61 = vector.extract_strided_slice %45 {offsets = [3, 0, 0], sizes = [1, 8, 8], strides = [1, 1, 1]} : vector<4x8x8xf32> to vector<1x8x8xf32>
      %62 = vector.shape_cast %61 : vector<1x8x8xf32> to vector<8x8xf32>
      %c0_51 = arith.constant 0 : index
      %c0_52 = arith.constant 0 : index
      %c24 = arith.constant 24 : index
      %63 = vector.load %arg7[%c0_51, %c0_52, %c24] : memref<1x8x32xf32, #tpu.memory_space<vmem>>, vector<1x8x8xf32>
      %64 = vector.shape_cast %63 : vector<1x8x8xf32> to vector<8x8xf32>
      %65 = vector.shape_cast %62 : vector<8x8xf32> to vector<1x8x8xf32>
      tpu.vector_store %arg7[%c0_51, %c0_52, %c24], %65 {strides = array<i32>} : memref<1x8x32xf32, #tpu.memory_space<vmem>>, vector<1x8x8xf32>,
    } else {
    }
    return
  }
  func.func @transform_0(%arg0: i32, %arg1: i32, %arg2: i32) -> (i32, i32, i32, i32) {
    %c0_i32 = arith.constant 0 : i32
    %c0_i32_0 = arith.constant 0 : i32
    %c0_i32_1 = arith.constant 0 : i32
    return %arg0, %c0_i32, %arg1, %c0_i32_0 : i32, i32, i32, i32
  }
  func.func @transform_1(%arg0: i32, %arg1: i32, %arg2: i32) -> (i32, i32, i32, i32) {
    %c0_i32 = arith.constant 0 : i32
    %c0_i32_0 = arith.constant 0 : i32
    %c0_i32_1 = arith.constant 0 : i32
    return %arg0, %c0_i32, %arg2, %c0_i32_0 : i32, i32, i32, i32
  }
  func.func @transform_2(%arg0: i32, %arg1: i32, %arg2: i32) -> (i32, i32, i32, i32) {
    %c0_i32 = arith.constant 0 : i32
    %c0_i32_0 = arith.constant 0 : i32
    %c0_i32_1 = arith.constant 0 : i32
    return %arg0, %c0_i32, %arg2, %c0_i32_0 : i32, i32, i32, i32
  }
  func.func @transform_3(%arg0: i32, %arg1: i32, %arg2: i32) -> (i32, i32, i32) {
    %c0_i32 = arith.constant 0 : i32
    return %arg0, %arg1, %arg2 : i32, i32, i32
  }
  func.func @transform_4(%arg0: i32, %arg1: i32, %arg2: i32) -> (i32, i32, i32) {
    %c0_i32 = arith.constant 0 : i32
    %c0_i32_0 = arith.constant 0 : i32
    return %arg0, %arg1, %c0_i32 : i32, i32, i32
  }
}

</mosaic_0001>

<llo_original>
// kernel: tpu_custom_call.1
$region0: #{tpu_custom_call.1}
  #allocation0 [shape = 'u32[]', space=smem, size = 0x4, offset = 0x4, fixed_abs, tag = 'smem constant byte address 0x4 - core index']
  #allocation1 [shape = 'u32[144,128]{1,0:T(1,128)}', space=vmem, size = 0x12000, scoped, tag = 'internal scratch']
  #allocation2 [shape = 'f32[4,8,1]{2,1,0:T(8,128)}', space=vmem, size = 0x4000, scoped, tag = 'scratch operand']
  #allocation3 [shape = 'f32[4,8,1]{2,1,0:T(8,128)}', space=vmem, size = 0x4000, scoped, tag = 'scratch operand']
  #allocation4 [shape = 'f32[4,8,8]{2,1,0:T(8,128)}', space=vmem, size = 0x4000, scoped, tag = 'scratch operand']
  %s0 = inlined_call_operand.hbm [shape: f32[2,4,8,8], index: 0, kind: input, shape index: {}]
  %s1 = inlined_call_operand.hbm [shape: f32[2,4,8,8], index: 1, kind: input, shape index: {}]
  %s2 = inlined_call_operand.hbm [shape: f32[2,4,8,8], index: 2, kind: input, shape index: {}]
  %s3 = inlined_call_operand.hbm [shape: bf16[2,8,8], index: 3, kind: input, shape index: {}]
  %s4 = inlined_call_operand.hbm [shape: f32[2,8,32], index: 4, kind: output, shape index: {}]
  %s5 = sld [smem:[#allocation0]]
  $region73: #{tpu_custom_call.1} parent=0
    _
  %s7 = ssub.s32 1, %s5
  %s8 = scalar_select 0, %s7, %s5
  $region1: #{tpu_custom_call.1} parent=0
    #allocation5 [shape = 'u8[32768]{0}', space=vmem, size = 0x8000, scoped, tag = 'input window, operand 0']
    #allocation6 [shape = 's32[2]{0}', space=sflag, size = 0x8, scoped, tag = 'scoped memory for tpu_custom_call.1']
    #allocation7 [shape = 's32[2]{0}', space=sflag, size = 0x8, scoped, tag = 'scoped memory for tpu_custom_call.1']
    #allocation8 [shape = 'u8[32768]{0}', space=vmem, size = 0x8000, scoped, tag = 'input window, operand 1']
    #allocation9 [shape = 's32[2]{0}', space=sflag, size = 0x8, scoped, tag = 'scoped memory for tpu_custom_call.1']
    #allocation10 [shape = 'u8[32768]{0}', space=vmem, size = 0x8000, scoped, tag = 'input window, operand 2']
    #allocation11 [shape = 'u8[4096]{0}', space=vmem, size = 0x1000, scoped, tag = 'input window, operand 3']
    #allocation12 [shape = 's32[2]{0}', space=sflag, size = 0x8, scoped, tag = 'scoped memory for tpu_custom_call.1']
    #allocation13 [shape = 'u8[8192]{0}', space=vmem, size = 0x2000, scoped, tag = 'output window, operand 0']
    %9 = vsyncpa [#allocation6], 0
    %s10 = scalar_lea.sflag [#allocation6], 1
    %11 = vsyncpa %s10, 0
    %12 = vsyncpa [#allocation9], 0
    %s13 = scalar_lea.sflag [#allocation9], 1
    %14 = vsyncpa %s13, 0
    %15 = vsyncpa [#allocation12], 0
    %s16 = scalar_lea.sflag [#allocation12], 1
    %17 = vsyncpa %s16, 0
    %18 = vsyncpa [#allocation7], 0
    %s19 = scalar_lea.sflag [#allocation7], 1
    %20 = vsyncpa %s19, 0
    loop: start=0, step=1, limit=4
    $region2: #{tpu_custom_call.1} parent=1 // loop_pre_header
      _
    $region3: #{tpu_custom_call.1} parent=1 // loop_header
      %s22 = sphi 0, %s26
      %p23 = scmp.ge.s32.totalorder %s22, 4
      %s29 = sphi 0, %s48
      %s30 = sphi 0, %s44
      %s31 = sphi 0, %s40
      %s32 = sphi 0, %s29
      %s33 = sphi 0, %s30
      %s34 = sphi 0, %s31
      %s35 = sphi 0, %s32
      %s36 = sphi 0, %s33
      %s37 = sphi 0, %s34
      %s53 = sphi 0, %s55
      %s56 = sphi 0, %s53
      %s57 = sphi 0, %s56
      %s73 = sphi 0, %s57
      %s81 = sphi 0, %s83
      %s84 = sphi 0, %s81
      %s85 = sphi 0, %s84
      %s101 = sphi 0, %s85
      %s109 = sphi 0, %s111
      %s112 = sphi 0, %s109
      %s113 = sphi 0, %s112
      %s129 = sphi 0, %s113
      %s139 = sphi 0, %s141
      %s142 = sphi 0, %s139
      %s143 = sphi 0, %s142
      %s159 = sphi 0, %s143
      %s167 = sphi 0, %s169
      %s170 = sphi 0, %s167
      %s171 = sphi 0, %s170
      %s187 = sphi 0, %s171
    $region4: #{tpu_custom_call.1} parent=1 // loop_header_branch
      %25 = sbr.rel (%p23) target = $region8
    $region5: #{tpu_custom_call.1} parent=1 // loop_body
      %s27 = ssub.s32 %s22, 1
      %s28 = ssub.s32 %s22, 2
      %s38 = sadd.s32 1, %s31
      %p39 = scmp.ge.s32.totalorder %s38, 1
      %s40 = scalar_select %p39, 0, %s38
      %s41 = sadd.s32 1, %s30
      %s42 = scalar_select %p39, %s41, %s30
      %p43 = scmp.ge.s32.totalorder %s42, 1
      %s44 = scalar_select %p43, 0, %s42
      %s45 = sadd.s32 1, %s29
      %s46 = scalar_select %p43, %s45, %s29
      %p47 = scmp.ge.s32.totalorder %s46, 2
      %s48 = scalar_select %p47, 0, %s46
      %s49 = ssub.s32 %s29, %s48
      %s50 = ssub.s32 %s30, %s44
      %s51 = sor.u32 %s49, %s50
      %p52 = scmp.eq.s32.totalorder %s51, 0
      %s54 = sadd.s32 %s53, 1
      %s55 = scalar_select %p52, %s53, %s54
      %p58 = pneg %p52
      %p59 = scmp.eq.s32.totalorder %s22, 1
      %p60 = por %p58, %p59
      %p61 = scmp.ne.s32.totalorder %s53, %s56
      %p62 = scmp.eq.s32.totalorder %s22, 0
      %p63 = por %p61, %p62
      %p64 = scmp.ne.s32.totalorder %s53, %s56
      %p65 = scmp.eq.s32.totalorder %s27, 1
      %p66 = por %p64, %p65
      %p67 = scmp.ne.s32.totalorder %s56, %s57
      %p68 = scmp.eq.s32.totalorder %s27, 0
      %p69 = por %p67, %p68
      %p70 = scmp.ne.s32.totalorder %s56, %s57
      %p71 = scmp.eq.s32.totalorder %s28, 1
      %p72 = por %p70, %p71
      %p74 = scmp.ne.s32.totalorder %s57, %s73
      %p75 = scmp.eq.s32.totalorder %s28, 0
      %p76 = por %p74, %p75
      %s77 = ssub.s32 %s29, %s48
      %s78 = ssub.s32 %s31, %s40
      %s79 = sor.u32 %s77, %s78
      %p80 = scmp.eq.s32.totalorder %s79, 0
      %s82 = sadd.s32 %s81, 1
      %s83 = scalar_select %p80, %s81, %s82
      %p86 = pneg %p80
      %p87 = scmp.eq.s32.totalorder %s22, 1
      %p88 = por %p86, %p87
      %p89 = scmp.ne.s32.totalorder %s81, %s84
      %p90 = scmp.eq.s32.totalorder %s22, 0
      %p91 = por %p89, %p90
      %p92 = scmp.ne.s32.totalorder %s81, %s84
      %p93 = scmp.eq.s32.totalorder %s27, 1
      %p94 = por %p92, %p93
      %p95 = scmp.ne.s32.totalorder %s84, %s85
      %p96 = scmp.eq.s32.totalorder %s27, 0
      %p97 = por %p95, %p96
      %p98 = scmp.ne.s32.totalorder %s84, %s85
      %p99 = scmp.eq.s32.totalorder %s28, 1
      %p100 = por %p98, %p99
      %p102 = scmp.ne.s32.totalorder %s85, %s101
      %p103 = scmp.eq.s32.totalorder %s28, 0
      %p104 = por %p102, %p103
      %s105 = ssub.s32 %s29, %s48
      %s106 = ssub.s32 %s31, %s40
      %s107 = sor.u32 %s105, %s106
      %p108 = scmp.eq.s32.totalorder %s107, 0
      %s110 = sadd.s32 %s109, 1
      %s111 = scalar_select %p108, %s109, %s110
      %p114 = pneg %p108
      %p115 = scmp.eq.s32.totalorder %s22, 1
      %p116 = por %p114, %p115
      %p117 = scmp.ne.s32.totalorder %s109, %s112
      %p118 = scmp.eq.s32.totalorder %s22, 0
      %p119 = por %p117, %p118
      %p120 = scmp.ne.s32.totalorder %s109, %s112
      %p121 = scmp.eq.s32.totalorder %s27, 1
      %p122 = por %p120, %p121
      %p123 = scmp.ne.s32.totalorder %s112, %s113
      %p124 = scmp.eq.s32.totalorder %s27, 0
      %p125 = por %p123, %p124
      %p126 = scmp.ne.s32.totalorder %s112, %s113
      %p127 = scmp.eq.s32.totalorder %s28, 1
      %p128 = por %p126, %p127
      %p130 = scmp.ne.s32.totalorder %s113, %s129
      %p131 = scmp.eq.s32.totalorder %s28, 0
      %p132 = por %p130, %p131
      %s133 = ssub.s32 %s29, %s48
      %s134 = ssub.s32 %s30, %s44
      %s135 = sor.u32 %s133, %s134
      %s136 = ssub.s32 %s31, %s40
      %s137 = sor.u32 %s135, %s136
      %p138 = scmp.eq.s32.totalorder %s137, 0
      %s140 = sadd.s32 %s139, 1
      %s141 = scalar_select %p138, %s139, %s140
      %p144 = pneg %p138
      %p145 = scmp.eq.s32.totalorder %s22, 1
      %p146 = por %p144, %p145
      %p147 = scmp.ne.s32.totalorder %s139, %s142
      %p148 = scmp.eq.s32.totalorder %s22, 0
      %p149 = por %p147, %p148
      %p150 = scmp.ne.s32.totalorder %s139, %s142
      %p151 = scmp.eq.s32.totalorder %s27, 1
      %p152 = por %p150, %p151
      %p153 = scmp.ne.s32.totalorder %s142, %s143
      %p154 = scmp.eq.s32.totalorder %s27, 0
      %p155 = por %p153, %p154
      %p156 = scmp.ne.s32.totalorder %s142, %s143
      %p157 = scmp.eq.s32.totalorder %s28, 1
      %p158 = por %p156, %p157
      %p160 = scmp.ne.s32.totalorder %s143, %s159
      %p161 = scmp.eq.s32.totalorder %s28, 0
      %p162 = por %p160, %p161
      %s163 = ssub.s32 %s29, %s48
      %s164 = ssub.s32 %s30, %s44
      %s165 = sor.u32 %s163, %s164
      %p166 = scmp.eq.s32.totalorder %s165, 0
      %s168 = sadd.s32 %s167, 1
      %s169 = scalar_select %p166, %s167, %s168
      %p172 = pneg %p166
      %p173 = scmp.eq.s32.totalorder %s22, 1
      %p174 = por %p172, %p173
      %p175 = scmp.ne.s32.totalorder %s167, %s170
      %p176 = scmp.eq.s32.totalorder %s22, 0
      %p177 = por %p175, %p176
      %p178 = scmp.ne.s32.totalorder %s167, %s170
      %p179 = scmp.eq.s32.totalorder %s27, 1
      %p180 = por %p178, %p179
      %p181 = scmp.ne.s32.totalorder %s170, %s171
      %p182 = scmp.eq.s32.totalorder %s27, 0
      %p183 = por %p181, %p182
      %p184 = scmp.ne.s32.totalorder %s170, %s171
      %p185 = scmp.eq.s32.totalorder %s28, 1
      %p186 = por %p184, %p185
      %p188 = scmp.ne.s32.totalorder %s171, %s187
      %p189 = scmp.eq.s32.totalorder %s28, 0
      %p190 = por %p188, %p189
      %p191 = scmp.le.s32.totalorder 1, %s22
      %p192 = scmp.lt.s32.totalorder %s22, 3
      %p193 = pnand %p191, %p192
      %p194 = pneg %p193
      // Predicated region
      $region9: #{tpu_custom_call.1} parent=5 // pred_check
        _
      $region10: #{tpu_custom_call.1} parent=5 // pred_check_branch
        %196 = sbr.rel (%p193) target = $region12
      $region11: #{tpu_custom_call.1} parent=5 // pred_region
        %s197 = ssub.s32 %s22, 1
      $region12: #{tpu_custom_call.1} parent=5 // pred_fallthru
        _
      %p198 = scmp.lt.s32.totalorder %s22, 2
      // Predicated region
      $region13: #{tpu_custom_call.1} parent=5 // pred_check
        %p199 = pneg %p198
      $region14: #{tpu_custom_call.1} parent=5 // pred_check_branch
        %201 = sbr.rel (%p199) target = $region16
      $region15: #{tpu_custom_call.1} parent=5 // pred_region
        // Predicated region
        $region17: #{tpu_custom_call.1} parent=15 // pred_check
          %p202 = pneg %p63
        $region18: #{tpu_custom_call.1} parent=15 // pred_check_branch
          %204 = sbr.rel (%p202) target = $region20
        $region19: #{tpu_custom_call.1} parent=15 // pred_region
          %s205 = sand.u32 %s53, 1
          %s206 = scalar_lea.sflag [#allocation6], %s205
          %s207 = sand.u32 %s53, 1
          %s208 = smul.addr %s207, 32
          %s209 = scalar_lea.vmem [#allocation5], %s208
          %s211 = ssub.s32 512, 512
          %212 = vsyncadd %s206, %s211
          %s213 = smul.addr %s29, 4
          %s214 = sadd.s32 %s30, %s213
          %s215 = smul.addr %s214, 128
          %s216 = scalar_lea.hbm %s0, %s215
          %s217 = sshll.u32 %s209, 4
          %s218 = int_to_ptr.vmem [resolvable:$true] %s217
          %223 = dma.hbm_to_vmem [thread:$0]  %s216, 512, %s218, %s206, 128, 128, 8
        $region20: #{tpu_custom_call.1} parent=15 // pred_fallthru
          _
        // Predicated region
        $region21: #{tpu_custom_call.1} parent=15 // pred_check
          %p224 = pneg %p91
        $region22: #{tpu_custom_call.1} parent=15 // pred_check_branch
          %226 = sbr.rel (%p224) target = $region24
        $region23: #{tpu_custom_call.1} parent=15 // pred_region
          %s227 = sand.u32 %s22, 1
          %s228 = scalar_lea.sflag [#allocation9], %s227
          %s229 = sand.u32 %s81, 1
          %s230 = smul.addr %s229, 32
          %s231 = scalar_lea.vmem [#allocation8], %s230
          %s233 = ssub.s32 512, 512
          %234 = vsyncadd %s228, %s233
          %s235 = smul.addr %s29, 4
          %s236 = sadd.s32 %s31, %s235
          %s237 = smul.addr %s236, 128
          %s238 = scalar_lea.hbm %s1, %s237
          %s239 = sshll.u32 %s231, 4
          %s240 = int_to_ptr.vmem [resolvable:$true] %s239
          %245 = dma.hbm_to_vmem [thread:$0]  %s238, 512, %s240, %s228, 128, 128, 8
        $region24: #{tpu_custom_call.1} parent=15 // pred_fallthru
          _
        // Predicated region
        $region25: #{tpu_custom_call.1} parent=15 // pred_check
          %p246 = pneg %p119
        $region26: #{tpu_custom_call.1} parent=15 // pred_check_branch
          %248 = sbr.rel (%p246) target = $region28
        $region27: #{tpu_custom_call.1} parent=15 // pred_region
          %s249 = sand.u32 %s22, 1
          %s250 = scalar_lea.sflag [#allocation9], %s249
          %s251 = sand.u32 %s109, 1
          %s252 = smul.addr %s251, 32
          %s253 = scalar_lea.vmem [#allocation10], %s252
          %s255 = ssub.s32 512, 512
          %256 = vsyncadd %s250, %s255
          %s257 = smul.addr %s29, 4
          %s258 = sadd.s32 %s31, %s257
          %s259 = smul.addr %s258, 128
          %s260 = scalar_lea.hbm %s2, %s259
          %s261 = sshll.u32 %s253, 4
          %s262 = int_to_ptr.vmem [resolvable:$true] %s261
          %267 = dma.hbm_to_vmem [thread:$0]  %s260, 512, %s262, %s250, 128, 128, 8
        $region28: #{tpu_custom_call.1} parent=15 // pred_fallthru
          _
        // Predicated region
        $region29: #{tpu_custom_call.1} parent=15 // pred_check
          %p268 = pneg %p149
        $region30: #{tpu_custom_call.1} parent=15 // pred_check_branch
          %270 = sbr.rel (%p268) target = $region32
        $region31: #{tpu_custom_call.1} parent=15 // pred_region
          %s271 = sand.u32 %s139, 1
          %s272 = scalar_lea.sflag [#allocation12], %s271
          %s273 = sand.u32 %s139, 1
          %s274 = smul.addr %s273, 4
          %s275 = scalar_lea.vmem [#allocation11], %s274
          %s277 = ssub.s32 64, 64
          %278 = vsyncadd %s272, %s277
          %s279 = sadd.s32 %s31, %s30
          %s280 = sadd.s32 %s279, %s29
          %s281 = smul.addr %s280, 64
          %s282 = scalar_lea.hbm %s3, %s281
          %s284 = sshll.u32 %s275, 4
          %s285 = int_to_ptr.vmem [resolvable:$true] %s284
          %287 = dma.hbm_to_vmem [thread:$0]  %s282, 64, %s285, %s272
        $region32: #{tpu_custom_call.1} parent=15 // pred_fallthru
          _
      $region16: #{tpu_custom_call.1} parent=5 // pred_fallthru
        _
      %p288 = scmp.le.s32.totalorder 1, %s22
      %p289 = scmp.lt.s32.totalorder %s22, 3
      %p290 = pnand %p288, %p289
      %p291 = pneg %p290
      // Predicated region
      $region33: #{tpu_custom_call.1} parent=5 // pred_check
        _
      $region34: #{tpu_custom_call.1} parent=5 // pred_check_branch
        %293 = sbr.rel (%p290) target = $region36
      $region35: #{tpu_custom_call.1} parent=5 // pred_region
        %s294 = ssub.s32 %s22, 1
        %s295 = sand.u32 %s56, 1
        %s296 = scalar_lea.sflag [#allocation6], %s295
        %s297 = sand.u32 %s56, 1
        %s298 = smul.addr %s297, 32
        %s299 = scalar_lea.vmem [#allocation5], %s298
        // Predicated region
        $region37: #{tpu_custom_call.1} parent=35 // pred_check
          %p300 = pneg %p69
        $region38: #{tpu_custom_call.1} parent=35 // pred_check_branch
          %302 = sbr.rel (%p300) target = $region40
        $region39: #{tpu_custom_call.1} parent=35 // pred_region
          %303 = dma.done %s296, 512
        $region40: #{tpu_custom_call.1} parent=35 // pred_fallthru
          _
        %s304 = sand.u32 %s27, 1
        %s305 = scalar_lea.sflag [#allocation9], %s304
        %s306 = sand.u32 %s84, 1
        %s307 = smul.addr %s306, 32
        %s308 = scalar_lea.vmem [#allocation8], %s307
        // Predicated region
        $region41: #{tpu_custom_call.1} parent=35 // pred_check
          %p309 = pneg %p97
        $region42: #{tpu_custom_call.1} parent=35 // pred_check_branch
          %311 = sbr.rel (%p309) target = $region44
        $region43: #{tpu_custom_call.1} parent=35 // pred_region
          %312 = dma.done %s305, 512
        $region44: #{tpu_custom_call.1} parent=35 // pred_fallthru
          _
        %s313 = sand.u32 %s27, 1
        %s314 = scalar_lea.sflag [#allocation9], %s313
        %s315 = sand.u32 %s112, 1
        %s316 = smul.addr %s315, 32
        %s317 = scalar_lea.vmem [#allocation10], %s316
        // Predicated region
        $region45: #{tpu_custom_call.1} parent=35 // pred_check
          %p318 = pneg %p125
        $region46: #{tpu_custom_call.1} parent=35 // pred_check_branch
          %320 = sbr.rel (%p318) target = $region48
        $region47: #{tpu_custom_call.1} parent=35 // pred_region
          %321 = dma.done %s314, 512
        $region48: #{tpu_custom_call.1} parent=35 // pred_fallthru
          _
        %s322 = sand.u32 %s142, 1
        %s323 = scalar_lea.sflag [#allocation12], %s322
        %s324 = sand.u32 %s142, 1
        %s325 = smul.addr %s324, 4
        %s326 = scalar_lea.vmem [#allocation11], %s325
        // Predicated region
        $region49: #{tpu_custom_call.1} parent=35 // pred_check
          %p327 = pneg %p155
        $region50: #{tpu_custom_call.1} parent=35 // pred_check_branch
          %329 = sbr.rel (%p327) target = $region52
        $region51: #{tpu_custom_call.1} parent=35 // pred_region
          %330 = dma.done %s323, 64
        $region52: #{tpu_custom_call.1} parent=35 // pred_fallthru
          _
        %s331 = sand.u32 %s56, 1
        %s332 = scalar_lea.sflag [#allocation6], %s331
        %s333 = sand.u32 %s56, 1
        %s334 = smul.addr %s333, 32
        %s335 = scalar_lea.vmem [#allocation5], %s334
        %p336 = pneg %p69
        %p337 = pneg %p66
        %s338 = sand.u32 %s27, 1
        %s339 = scalar_lea.sflag [#allocation9], %s338
        %s340 = sand.u32 %s84, 1
        %s341 = smul.addr %s340, 32
        %s342 = scalar_lea.vmem [#allocation8], %s341
        %p343 = pneg %p97
        %p344 = pneg %p94
        %s345 = sand.u32 %s27, 1
        %s346 = scalar_lea.sflag [#allocation9], %s345
        %s347 = sand.u32 %s112, 1
        %s348 = smul.addr %s347, 32
        %s349 = scalar_lea.vmem [#allocation10], %s348
        %p350 = pneg %p125
        %p351 = pneg %p122
        %s352 = sand.u32 %s142, 1
        %s353 = scalar_lea.sflag [#allocation12], %s352
        %s354 = sand.u32 %s142, 1
        %s355 = smul.addr %s354, 4
        %s356 = scalar_lea.vmem [#allocation11], %s355
        %p357 = pneg %p155
        %p358 = pneg %p152
        %p359 = pneg %p183
        %p360 = pneg %p180
        %s361 = sand.u32 %s170, 1
        %s362 = scalar_lea.sflag [#allocation7], %s361
        %s363 = sand.u32 %s170, 1
        %s364 = smul.addr %s363, 8
        %s365 = scalar_lea.vmem [#allocation13], %s364
        %p366 = scmp.eq.s32.totalorder %s34, 0
        // Predicated region
        $region53: #{tpu_custom_call.1} parent=35 // pred_check
          %p367 = pneg %p366
        $region54: #{tpu_custom_call.1} parent=35 // pred_check_branch
          %369 = sbr.rel (%p367) target = $region56
        $region55: #{tpu_custom_call.1} parent=35 // pred_region
          %vm370 = vcmask 7168
          %371 = vst.msk [vmem:[#allocation2] sm:$0xff] %vm370, -inf
          %372 = vst.msk [vmem:[#allocation2 + $0x8] sm:$0xff] %vm370, -inf
          %373 = vst.msk [vmem:[#allocation2 + $0x10] sm:$0xff] %vm370, -inf
          %374 = vst.msk [vmem:[#allocation2 + $0x18] sm:$0xff] %vm370, -inf
          %375 = vst.msk [vmem:[#allocation3] sm:$0xff] %vm370, 0.0
          %376 = vst.msk [vmem:[#allocation3 + $0x8] sm:$0xff] %vm370, 0.0
          %377 = vst.msk [vmem:[#allocation3 + $0x10] sm:$0xff] %vm370, 0.0
          %378 = vst.msk [vmem:[#allocation3 + $0x18] sm:$0xff] %vm370, 0.0
          %vm379 = vcmask 64512
          %380 = vst.msk [vmem:[#allocation4] sm:$0xff] %vm379, 0.0
          %381 = vst.msk [vmem:[#allocation4 + $0x8] sm:$0xff] %vm379, 0.0
          %382 = vst.msk [vmem:[#allocation4 + $0x10] sm:$0xff] %vm379, 0.0
          %383 = vst.msk [vmem:[#allocation4 + $0x18] sm:$0xff] %vm379, 0.0
        $region56: #{tpu_custom_call.1} parent=35 // pred_fallthru
          _
        %v384 = vld [vmem:[%s299] sm:$0xff]
        %v385 = vld [vmem:[%s299 + $0x8] sm:$0xff]
        %v386 = vld [vmem:[%s299 + $0x10] sm:$0xff]
        %v387 = vld [vmem:[%s299 + $0x18] sm:$0xff]
        %v388 = vld [vmem:[%s308] sm:$0xff]
        %v389 = vld [vmem:[%s308 + $0x8] sm:$0xff]
        %v390 = vld [vmem:[%s308 + $0x10] sm:$0xff]
        %v391 = vld [vmem:[%s308 + $0x18] sm:$0xff]
        %v392 = vld [vmem:[%s326] sm:$0xf]
        %v393 = vunpack.c.l.bf16 %v392
        %vm394 = vcmask 64512
        %v396 = vsel %vm394, %v384, 0
        %v399 = vsel %vm394, %v388, 0
        %401 = vmatprep.subr.mxu0 0.0
        %402 = vmatpush1.xpose.msra.mxu0 0.0
        %403 = vmatprep.subr.mxu0 0.0
        %404 = vmatpush1.xpose.msra.mxu0 0.0
        %405 = vmatprep.subr.mxu0 0.0
        %406 = vmatpush1.xpose.msra.mxu0 0.0
        %407 = vmatprep.subr.mxu0 0.0
        %408 = vmatpush1.xpose.msra.mxu0 0.0
        %409 = vmatprep.subr.mxu0 0.0
        %410 = vmatpush1.xpose.msra.mxu0 0.0
        %411 = vmatprep.subr.mxu0 0.0
        %412 = vmatpush1.xpose.msra.mxu0 0.0
        %413 = vmatprep.subr.mxu0 0.0
        %414 = vmatpush1.xpose.msra.mxu0 0.0
        %415 = vmatprep.subr.mxu0 0.0
        %416 = vmatpush1.xpose.msra.mxu0 0.0
        %417 = vmatprep.subr.mxu0 0.0
        %418 = vmatpush1.xpose.msra.mxu0 0.0
        %419 = vmatprep.subr.mxu0 0.0
        %420 = vmatpush1.xpose.msra.mxu0 0.0
        %421 = vmatprep.subr.mxu0 0.0
        %422 = vmatpush1.xpose.msra.mxu0 0.0
        %423 = vmatprep.subr.mxu0 0.0
        %424 = vmatpush1.xpose.msra.mxu0 0.0
        %425 = vmatprep.subr.mxu0 0.0
        %426 = vmatpush1.xpose.msra.mxu0 0.0
        %427 = vmatprep.subr.mxu0 0.0
        %428 = vmatpush1.xpose.msra.mxu0 0.0
        %429 = vmatprep.subr.mxu0 0.0
        %430 = vmatpush1.xpose.msra.mxu0 0.0
        %431 = vmatprep.subr.mxu0 0.0
        %432 = vmatpush1.xpose.msra.mxu0 %v399
        %433 = vmatprep.subr.mxu0 0.0
        %434 = vmatpush2.xpose.msra.mxu0 0.0
        %435 = vmatprep.subr.mxu0 0.0
        %436 = vmatpush2.xpose.msra.mxu0 0.0
        %437 = vmatprep.subr.mxu0 0.0
        %438 = vmatpush2.xpose.msra.mxu0 0.0
        %439 = vmatprep.subr.mxu0 0.0
        %440 = vmatpush2.xpose.msra.mxu0 0.0
        %441 = vmatprep.subr.mxu0 0.0
        %442 = vmatpush2.xpose.msra.mxu0 0.0
        %443 = vmatprep.subr.mxu0 0.0
        %444 = vmatpush2.xpose.msra.mxu0 0.0
        %445 = vmatprep.subr.mxu0 0.0
        %446 = vmatpush2.xpose.msra.mxu0 0.0
        %447 = vmatprep.subr.mxu0 0.0
        %448 = vmatpush2.xpose.msra.mxu0 0.0
        %449 = vmatprep.subr.mxu0 0.0
        %450 = vmatpush2.xpose.msra.mxu0 0.0
        %451 = vmatprep.subr.mxu0 0.0
        %452 = vmatpush2.xpose.msra.mxu0 0.0
        %453 = vmatprep.subr.mxu0 0.0
        %454 = vmatpush2.xpose.msra.mxu0 0.0
        %455 = vmatprep.subr.mxu0 0.0
        %456 = vmatpush2.xpose.msra.mxu0 0.0
        %457 = vmatprep.subr.mxu0 0.0
        %458 = vmatpush2.xpose.msra.mxu0 0.0
        %459 = vmatprep.subr.mxu0 0.0
        %460 = vmatpush2.xpose.msra.mxu0 0.0
        %461 = vmatprep.subr.mxu0 0.0
        %462 = vmatpush2.xpose.msra.mxu0 0.0
        %463 = vmatprep.subr.mxu0 0.0
        %464 = vmatpush2.xpose.msra.mxu0 0.0
        %465 = vmatprep.mubr.f32.mxu0 0.0
        %466 = vmatmul.mubr.f32.gmra.mxu0 %v396
        %v467 = vpop.f32.mrf.mxu0
        %v468 = vadd.f32 %v393, %v467
        %v469 = vpop.f32.mrf.mxu0
        %470 = vdwg.mxu0
        %v472 = vsel %vm394, %v385, 0
        %v475 = vsel %vm394, %v389, 0
        %477 = vmatprep.subr.mxu0 0.0
        %478 = vmatpush1.xpose.msra.mxu0 0.0
        %479 = vmatprep.subr.mxu0 0.0
        %480 = vmatpush1.xpose.msra.mxu0 0.0
        %481 = vmatprep.subr.mxu0 0.0
        %482 = vmatpush1.xpose.msra.mxu0 0.0
        %483 = vmatprep.subr.mxu0 0.0
        %484 = vmatpush1.xpose.msra.mxu0 0.0
        %485 = vmatprep.subr.mxu0 0.0
        %486 = vmatpush1.xpose.msra.mxu0 0.0
        %487 = vmatprep.subr.mxu0 0.0
        %488 = vmatpush1.xpose.msra.mxu0 0.0
        %489 = vmatprep.subr.mxu0 0.0
        %490 = vmatpush1.xpose.msra.mxu0 0.0
        %491 = vmatprep.subr.mxu0 0.0
        %492 = vmatpush1.xpose.msra.mxu0 0.0
        %493 = vmatprep.subr.mxu0 0.0
        %494 = vmatpush1.xpose.msra.mxu0 0.0
        %495 = vmatprep.subr.mxu0 0.0
        %496 = vmatpush1.xpose.msra.mxu0 0.0
        %497 = vmatprep.subr.mxu0 0.0
        %498 = vmatpush1.xpose.msra.mxu0 0.0
        %499 = vmatprep.subr.mxu0 0.0
        %500 = vmatpush1.xpose.msra.mxu0 0.0
        %501 = vmatprep.subr.mxu0 0.0
        %502 = vmatpush1.xpose.msra.mxu0 0.0
        %503 = vmatprep.subr.mxu0 0.0
        %504 = vmatpush1.xpose.msra.mxu0 0.0
        %505 = vmatprep.subr.mxu0 0.0
        %506 = vmatpush1.xpose.msra.mxu0 0.0
        %507 = vmatprep.subr.mxu0 0.0
        %508 = vmatpush1.xpose.msra.mxu0 %v475
        %509 = vmatprep.subr.mxu0 0.0
        %510 = vmatpush2.xpose.msra.mxu0 0.0
        %511 = vmatprep.subr.mxu0 0.0
        %512 = vmatpush2.xpose.msra.mxu0 0.0
        %513 = vmatprep.subr.mxu0 0.0
        %514 = vmatpush2.xpose.msra.mxu0 0.0
        %515 = vmatprep.subr.mxu0 0.0
        %516 = vmatpush2.xpose.msra.mxu0 0.0
        %517 = vmatprep.subr.mxu0 0.0
        %518 = vmatpush2.xpose.msra.mxu0 0.0
        %519 = vmatprep.subr.mxu0 0.0
        %520 = vmatpush2.xpose.msra.mxu0 0.0
        %521 = vmatprep.subr.mxu0 0.0
        %522 = vmatpush2.xpose.msra.mxu0 0.0
        %523 = vmatprep.subr.mxu0 0.0
        %524 = vmatpush2.xpose.msra.mxu0 0.0
        %525 = vmatprep.subr.mxu0 0.0
        %526 = vmatpush2.xpose.msra.mxu0 0.0
        %527 = vmatprep.subr.mxu0 0.0
        %528 = vmatpush2.xpose.msra.mxu0 0.0
        %529 = vmatprep.subr.mxu0 0.0
        %530 = vmatpush2.xpose.msra.mxu0 0.0
        %531 = vmatprep.subr.mxu0 0.0
        %532 = vmatpush2.xpose.msra.mxu0 0.0
        %533 = vmatprep.subr.mxu0 0.0
        %534 = vmatpush2.xpose.msra.mxu0 0.0
        %535 = vmatprep.subr.mxu0 0.0
        %536 = vmatpush2.xpose.msra.mxu0 0.0
        %537 = vmatprep.subr.mxu0 0.0
        %538 = vmatpush2.xpose.msra.mxu0 0.0
        %539 = vmatprep.subr.mxu0 0.0
        %540 = vmatpush2.xpose.msra.mxu0 0.0
        %541 = vmatprep.mubr.f32.mxu0 0.0
        %542 = vmatmul.mubr.f32.gmra.mxu0 %v472
        %v543 = vpop.f32.mrf.mxu0
        %v544 = vadd.f32 %v393, %v543
        %v545 = vpop.f32.mrf.mxu0
        %546 = vdwg.mxu0
        %v548 = vsel %vm394, %v386, 0
        %v551 = vsel %vm394, %v390, 0
        %553 = vmatprep.subr.mxu0 0.0
        %554 = vmatpush1.xpose.msra.mxu0 0.0
        %555 = vmatprep.subr.mxu0 0.0
        %556 = vmatpush1.xpose.msra.mxu0 0.0
        %557 = vmatprep.subr.mxu0 0.0
        %558 = vmatpush1.xpose.msra.mxu0 0.0
        %559 = vmatprep.subr.mxu0 0.0
        %560 = vmatpush1.xpose.msra.mxu0 0.0
        %561 = vmatprep.subr.mxu0 0.0
        %562 = vmatpush1.xpose.msra.mxu0 0.0
        %563 = vmatprep.subr.mxu0 0.0
        %564 = vmatpush1.xpose.msra.mxu0 0.0
        %565 = vmatprep.subr.mxu0 0.0
        %566 = vmatpush1.xpose.msra.mxu0 0.0
        %567 = vmatprep.subr.mxu0 0.0
        %568 = vmatpush1.xpose.msra.mxu0 0.0
        %569 = vmatprep.subr.mxu0 0.0
        %570 = vmatpush1.xpose.msra.mxu0 0.0
        %571 = vmatprep.subr.mxu0 0.0
        %572 = vmatpush1.xpose.msra.mxu0 0.0
        %573 = vmatprep.subr.mxu0 0.0
        %574 = vmatpush1.xpose.msra.mxu0 0.0
        %575 = vmatprep.subr.mxu0 0.0
        %576 = vmatpush1.xpose.msra.mxu0 0.0
        %577 = vmatprep.subr.mxu0 0.0
        %578 = vmatpush1.xpose.msra.mxu0 0.0
        %579 = vmatprep.subr.mxu0 0.0
        %580 = vmatpush1.xpose.msra.mxu0 0.0
        %581 = vmatprep.subr.mxu0 0.0
        %582 = vmatpush1.xpose.msra.mxu0 0.0
        %583 = vmatprep.subr.mxu0 0.0
        %584 = vmatpush1.xpose.msra.mxu0 %v551
        %585 = vmatprep.subr.mxu0 0.0
        %586 = vmatpush2.xpose.msra.mxu0 0.0
        %587 = vmatprep.subr.mxu0 0.0
        %588 = vmatpush2.xpose.msra.mxu0 0.0
        %589 = vmatprep.subr.mxu0 0.0
        %590 = vmatpush2.xpose.msra.mxu0 0.0
        %591 = vmatprep.subr.mxu0 0.0
        %592 = vmatpush2.xpose.msra.mxu0 0.0
        %593 = vmatprep.subr.mxu0 0.0
        %594 = vmatpush2.xpose.msra.mxu0 0.0
        %595 = vmatprep.subr.mxu0 0.0
        %596 = vmatpush2.xpose.msra.mxu0 0.0
        %597 = vmatprep.subr.mxu0 0.0
        %598 = vmatpush2.xpose.msra.mxu0 0.0
        %599 = vmatprep.subr.mxu0 0.0
        %600 = vmatpush2.xpose.msra.mxu0 0.0
        %601 = vmatprep.subr.mxu0 0.0
        %602 = vmatpush2.xpose.msra.mxu0 0.0
        %603 = vmatprep.subr.mxu0 0.0
        %604 = vmatpush2.xpose.msra.mxu0 0.0
        %605 = vmatprep.subr.mxu0 0.0
        %606 = vmatpush2.xpose.msra.mxu0 0.0
        %607 = vmatprep.subr.mxu0 0.0
        %608 = vmatpush2.xpose.msra.mxu0 0.0
        %609 = vmatprep.subr.mxu0 0.0
        %610 = vmatpush2.xpose.msra.mxu0 0.0
        %611 = vmatprep.subr.mxu0 0.0
        %612 = vmatpush2.xpose.msra.mxu0 0.0
        %613 = vmatprep.subr.mxu0 0.0
        %614 = vmatpush2.xpose.msra.mxu0 0.0
        %615 = vmatprep.subr.mxu0 0.0
        %616 = vmatpush2.xpose.msra.mxu0 0.0
        %617 = vmatprep.mubr.f32.mxu0 0.0
        %618 = vmatmul.mubr.f32.gmra.mxu0 %v548
        %v619 = vpop.f32.mrf.mxu0
        %v620 = vadd.f32 %v393, %v619
        %v621 = vpop.f32.mrf.mxu0
        %622 = vdwg.mxu0
        %v624 = vsel %vm394, %v387, 0
        %v627 = vsel %vm394, %v391, 0
        %629 = vmatprep.subr.mxu0 0.0
        %630 = vmatpush1.xpose.msra.mxu0 0.0
        %631 = vmatprep.subr.mxu0 0.0
        %632 = vmatpush1.xpose.msra.mxu0 0.0
        %633 = vmatprep.subr.mxu0 0.0
        %634 = vmatpush1.xpose.msra.mxu0 0.0
        %635 = vmatprep.subr.mxu0 0.0
        %636 = vmatpush1.xpose.msra.mxu0 0.0
        %637 = vmatprep.subr.mxu0 0.0
        %638 = vmatpush1.xpose.msra.mxu0 0.0
        %639 = vmatprep.subr.mxu0 0.0
        %640 = vmatpush1.xpose.msra.mxu0 0.0
        %641 = vmatprep.subr.mxu0 0.0
        %642 = vmatpush1.xpose.msra.mxu0 0.0
        %643 = vmatprep.subr.mxu0 0.0
        %644 = vmatpush1.xpose.msra.mxu0 0.0
        %645 = vmatprep.subr.mxu0 0.0
        %646 = vmatpush1.xpose.msra.mxu0 0.0
        %647 = vmatprep.subr.mxu0 0.0
        %648 = vmatpush1.xpose.msra.mxu0 0.0
        %649 = vmatprep.subr.mxu0 0.0
        %650 = vmatpush1.xpose.msra.mxu0 0.0
        %651 = vmatprep.subr.mxu0 0.0
        %652 = vmatpush1.xpose.msra.mxu0 0.0
        %653 = vmatprep.subr.mxu0 0.0
        %654 = vmatpush1.xpose.msra.mxu0 0.0
        %655 = vmatprep.subr.mxu0 0.0
        %656 = vmatpush1.xpose.msra.mxu0 0.0
        %657 = vmatprep.subr.mxu0 0.0
        %658 = vmatpush1.xpose.msra.mxu0 0.0
        %659 = vmatprep.subr.mxu0 0.0
        %660 = vmatpush1.xpose.msra.mxu0 %v627
        %661 = vmatprep.subr.mxu0 0.0
        %662 = vmatpush2.xpose.msra.mxu0 0.0
        %663 = vmatprep.subr.mxu0 0.0
        %664 = vmatpush2.xpose.msra.mxu0 0.0
        %665 = vmatprep.subr.mxu0 0.0
        %666 = vmatpush2.xpose.msra.mxu0 0.0
        %667 = vmatprep.subr.mxu0 0.0
        %668 = vmatpush2.xpose.msra.mxu0 0.0
        %669 = vmatprep.subr.mxu0 0.0
        %670 = vmatpush2.xpose.msra.mxu0 0.0
        %671 = vmatprep.subr.mxu0 0.0
        %672 = vmatpush2.xpose.msra.mxu0 0.0
        %673 = vmatprep.subr.mxu0 0.0
        %674 = vmatpush2.xpose.msra.mxu0 0.0
        %675 = vmatprep.subr.mxu0 0.0
        %676 = vmatpush2.xpose.msra.mxu0 0.0
        %677 = vmatprep.subr.mxu0 0.0
        %678 = vmatpush2.xpose.msra.mxu0 0.0
        %679 = vmatprep.subr.mxu0 0.0
        %680 = vmatpush2.xpose.msra.mxu0 0.0
        %681 = vmatprep.subr.mxu0 0.0
        %682 = vmatpush2.xpose.msra.mxu0 0.0
        %683 = vmatprep.subr.mxu0 0.0
        %684 = vmatpush2.xpose.msra.mxu0 0.0
        %685 = vmatprep.subr.mxu0 0.0
        %686 = vmatpush2.xpose.msra.mxu0 0.0
        %687 = vmatprep.subr.mxu0 0.0
        %688 = vmatpush2.xpose.msra.mxu0 0.0
        %689 = vmatprep.subr.mxu0 0.0
        %690 = vmatpush2.xpose.msra.mxu0 0.0
        %691 = vmatprep.subr.mxu0 0.0
        %692 = vmatpush2.xpose.msra.mxu0 0.0
        %693 = vmatprep.mubr.f32.mxu0 0.0
        %694 = vmatmul.mubr.f32.gmra.mxu0 %v624
        %v695 = vpop.f32.mrf.mxu0
        %v696 = vadd.f32 %v393, %v695
        %v697 = vpop.f32.mrf.mxu0
        %698 = vdwg.mxu0
        %v699 = vld [vmem:[#allocation2] sm:$0xff]
        %v700 = vld [vmem:[#allocation2 + $0x8] sm:$0xff]
        %v701 = vld [vmem:[#allocation2 + $0x10] sm:$0xff]
        %v702 = vld [vmem:[#allocation2 + $0x18] sm:$0xff]
        %v703 = vsel %vm394, %v468, -inf
        %704 = vmax.xlane.f32.xlu0 %v703
        %v705 = vpop.xlane.xlu0 %704
        %v706 = vsel %vm394, %v544, -inf
        %707 = vmax.xlane.f32.xlu0 %v706
        %v708 = vpop.xlane.xlu0 %707
        %v709 = vsel %vm394, %v620, -inf
        %710 = vmax.xlane.f32.xlu0 %v709
        %v711 = vpop.xlane.xlu0 %710
        %v712 = vsel %vm394, %v696, -inf
        %713 = vmax.xlane.f32.xlu0 %v712
        %v714 = vpop.xlane.xlu0 %713
        %v715 = vmax.f32 %v699, %v705
        %v716 = vmax.f32 %v700, %v708
        %v717 = vmax.f32 %v701, %v711
        %v718 = vmax.f32 %v702, %v714
        %v719 = vsub.f32 %v699, %v715
        %v720 = vsub.f32 %v700, %v716
        %v721 = vsub.f32 %v701, %v717
        %v722 = vsub.f32 %v702, %v718
        %v723 = vmul.f32 %v719, 1.442695
        %v724 = vpow.pop %v723
        %v725 = vmul.f32 %v720, 1.442695
        %v726 = vpow.pop %v725
        %v727 = vmul.f32 %v721, 1.442695
        %v728 = vpow.pop %v727
        %v729 = vmul.f32 %v722, 1.442695
        %v730 = vpow.pop %v729
        %732 = vset.pattern.permute.xlu0 0
        %733 = vperm.xlu0 %732, %v715
        %v734 = vpop.permute.xlu0 %733
        %737 = vset.pattern.permute.xlu0 0
        %738 = vperm.xlu0 %737, %v716
        %v739 = vpop.permute.xlu0 %738
        %742 = vset.pattern.permute.xlu0 0
        %743 = vperm.xlu0 %742, %v717
        %v744 = vpop.permute.xlu0 %743
        %747 = vset.pattern.permute.xlu0 0
        %748 = vperm.xlu0 %747, %v718
        %v749 = vpop.permute.xlu0 %748
        %v751 = vsub.f32 %v468, %v734
        %v752 = vsub.f32 %v544, %v739
        %v753 = vsub.f32 %v620, %v744
        %v754 = vsub.f32 %v696, %v749
        %v755 = vmul.f32 %v751, 1.442695
        %v756 = vpow.pop %v755
        %v757 = vmul.f32 %v752, 1.442695
        %v758 = vpow.pop %v757
        %v759 = vmul.f32 %v753, 1.442695
        %v760 = vpow.pop %v759
        %v761 = vmul.f32 %v754, 1.442695
        %v762 = vpow.pop %v761
        %v763 = vld [vmem:[#allocation3] sm:$0xff]
        %v764 = vld [vmem:[#allocation3 + $0x8] sm:$0xff]
        %v765 = vld [vmem:[#allocation3 + $0x10] sm:$0xff]
        %v766 = vld [vmem:[#allocation3 + $0x18] sm:$0xff]
        %v767 = vmul.f32 %v724, %v763
        %v768 = vmul.f32 %v726, %v764
        %v769 = vmul.f32 %v728, %v765
        %v770 = vmul.f32 %v730, %v766
        %v771 = vsel %vm394, %v756, 0.0
        %772 = vadd.xlane.f32.xlu0 %v771
        %v773 = vpop.xlane.xlu0 %772
        %v774 = vsel %vm394, %v758, 0.0
        %775 = vadd.xlane.f32.xlu0 %v774
        %v776 = vpop.xlane.xlu0 %775
        %v777 = vsel %vm394, %v760, 0.0
        %778 = vadd.xlane.f32.xlu0 %v777
        %v779 = vpop.xlane.xlu0 %778
        %v780 = vsel %vm394, %v762, 0.0
        %781 = vadd.xlane.f32.xlu0 %v780
        %v782 = vpop.xlane.xlu0 %781
        %v783 = vadd.f32 %v767, %v773
        %v784 = vadd.f32 %v768, %v776
        %v785 = vadd.f32 %v769, %v779
        %v786 = vadd.f32 %v770, %v782
        %vm787 = vcmask 7168
        %788 = vst.msk [vmem:[#allocation3] sm:$0xff] %vm787, %v783
        %789 = vst.msk [vmem:[#allocation3 + $0x8] sm:$0xff] %vm787, %v784
        %790 = vst.msk [vmem:[#allocation3 + $0x10] sm:$0xff] %vm787, %v785
        %791 = vst.msk [vmem:[#allocation3 + $0x18] sm:$0xff] %vm787, %v786
        %v792 = vld [vmem:[#allocation4] sm:$0xff]
        %v793 = vld [vmem:[#allocation4 + $0x8] sm:$0xff]
        %v794 = vld [vmem:[#allocation4 + $0x10] sm:$0xff]
        %v795 = vld [vmem:[#allocation4 + $0x18] sm:$0xff]
        %797 = vset.pattern.permute.xlu0 0
        %798 = vperm.xlu0 %797, %v724
        %v799 = vpop.permute.xlu0 %798
        %802 = vset.pattern.permute.xlu0 0
        %803 = vperm.xlu0 %802, %v726
        %v804 = vpop.permute.xlu0 %803
        %807 = vset.pattern.permute.xlu0 0
        %808 = vperm.xlu0 %807, %v728
        %v809 = vpop.permute.xlu0 %808
        %812 = vset.pattern.permute.xlu0 0
        %813 = vperm.xlu0 %812, %v730
        %v814 = vpop.permute.xlu0 %813
        %v816 = vmul.f32 %v799, %v792
        %v817 = vmul.f32 %v804, %v793
        %v818 = vmul.f32 %v809, %v794
        %v819 = vmul.f32 %v814, %v795
        %v820 = vld [vmem:[%s317] sm:$0xff]
        %v821 = vld [vmem:[%s317 + $0x8] sm:$0xff]
        %v822 = vld [vmem:[%s317 + $0x10] sm:$0xff]
        %v823 = vld [vmem:[%s317 + $0x18] sm:$0xff]
        %v825 = vsel %vm394, %v756, 0
        %827 = vmatprep.subr.mxu0 0.0
        %828 = vmatpush1.msra.mxu0 0.0
        %829 = vmatprep.subr.mxu0 0.0
        %830 = vmatpush1.msra.mxu0 0.0
        %831 = vmatprep.subr.mxu0 0.0
        %832 = vmatpush1.msra.mxu0 0.0
        %833 = vmatprep.subr.mxu0 0.0
        %834 = vmatpush1.msra.mxu0 0.0
        %835 = vmatprep.subr.mxu0 0.0
        %836 = vmatpush1.msra.mxu0 0.0
        %837 = vmatprep.subr.mxu0 0.0
        %838 = vmatpush1.msra.mxu0 0.0
        %839 = vmatprep.subr.mxu0 0.0
        %840 = vmatpush1.msra.mxu0 0.0
        %841 = vmatprep.subr.mxu0 0.0
        %842 = vmatpush1.msra.mxu0 0.0
        %843 = vmatprep.subr.mxu0 0.0
        %844 = vmatpush1.msra.mxu0 0.0
        %845 = vmatprep.subr.mxu0 0.0
        %846 = vmatpush1.msra.mxu0 0.0
        %847 = vmatprep.subr.mxu0 0.0
        %848 = vmatpush1.msra.mxu0 0.0
        %849 = vmatprep.subr.mxu0 0.0
        %850 = vmatpush1.msra.mxu0 0.0
        %851 = vmatprep.subr.mxu0 0.0
        %852 = vmatpush1.msra.mxu0 0.0
        %853 = vmatprep.subr.mxu0 0.0
        %854 = vmatpush1.msra.mxu0 0.0
        %855 = vmatprep.subr.mxu0 0.0
        %856 = vmatpush1.msra.mxu0 0.0
        %857 = vmatprep.subr.mxu0 0.0
        %858 = vmatpush1.msra.mxu0 %v820
        %859 = vmatprep.subr.mxu0 0.0
        %860 = vmatpush2.msra.mxu0 0.0
        %861 = vmatprep.subr.mxu0 0.0
        %862 = vmatpush2.msra.mxu0 0.0
        %863 = vmatprep.subr.mxu0 0.0
        %864 = vmatpush2.msra.mxu0 0.0
        %865 = vmatprep.subr.mxu0 0.0
        %866 = vmatpush2.msra.mxu0 0.0
        %867 = vmatprep.subr.mxu0 0.0
        %868 = vmatpush2.msra.mxu0 0.0
        %869 = vmatprep.subr.mxu0 0.0
        %870 = vmatpush2.msra.mxu0 0.0
        %871 = vmatprep.subr.mxu0 0.0
        %872 = vmatpush2.msra.mxu0 0.0
        %873 = vmatprep.subr.mxu0 0.0
        %874 = vmatpush2.msra.mxu0 0.0
        %875 = vmatprep.subr.mxu0 0.0
        %876 = vmatpush2.msra.mxu0 0.0
        %877 = vmatprep.subr.mxu0 0.0
        %878 = vmatpush2.msra.mxu0 0.0
        %879 = vmatprep.subr.mxu0 0.0
        %880 = vmatpush2.msra.mxu0 0.0
        %881 = vmatprep.subr.mxu0 0.0
        %882 = vmatpush2.msra.mxu0 0.0
        %883 = vmatprep.subr.mxu0 0.0
        %884 = vmatpush2.msra.mxu0 0.0
        %885 = vmatprep.subr.mxu0 0.0
        %886 = vmatpush2.msra.mxu0 0.0
        %887 = vmatprep.subr.mxu0 0.0
        %888 = vmatpush2.msra.mxu0 0.0
        %889 = vmatprep.subr.mxu0 0.0
        %890 = vmatpush2.msra.mxu0 0.0
        %891 = vmatprep.mubr.f32.mxu0 0.0
        %892 = vmatmul.mubr.f32.gmra.mxu0 %v825
        %v893 = vpop.f32.mrf.mxu0
        %v894 = vadd.f32 0.0, %v893
        %v895 = vpop.f32.mrf.mxu0
        %896 = vdwg.mxu0
        %v898 = vsel %vm394, %v758, 0
        %900 = vmatprep.subr.mxu0 0.0
        %901 = vmatpush1.msra.mxu0 0.0
        %902 = vmatprep.subr.mxu0 0.0
        %903 = vmatpush1.msra.mxu0 0.0
        %904 = vmatprep.subr.mxu0 0.0
        %905 = vmatpush1.msra.mxu0 0.0
        %906 = vmatprep.subr.mxu0 0.0
        %907 = vmatpush1.msra.mxu0 0.0
        %908 = vmatprep.subr.mxu0 0.0
        %909 = vmatpush1.msra.mxu0 0.0
        %910 = vmatprep.subr.mxu0 0.0
        %911 = vmatpush1.msra.mxu0 0.0
        %912 = vmatprep.subr.mxu0 0.0
        %913 = vmatpush1.msra.mxu0 0.0
        %914 = vmatprep.subr.mxu0 0.0
        %915 = vmatpush1.msra.mxu0 0.0
        %916 = vmatprep.subr.mxu0 0.0
        %917 = vmatpush1.msra.mxu0 0.0
        %918 = vmatprep.subr.mxu0 0.0
        %919 = vmatpush1.msra.mxu0 0.0
        %920 = vmatprep.subr.mxu0 0.0
        %921 = vmatpush1.msra.mxu0 0.0
        %922 = vmatprep.subr.mxu0 0.0
        %923 = vmatpush1.msra.mxu0 0.0
        %924 = vmatprep.subr.mxu0 0.0
        %925 = vmatpush1.msra.mxu0 0.0
        %926 = vmatprep.subr.mxu0 0.0
        %927 = vmatpush1.msra.mxu0 0.0
        %928 = vmatprep.subr.mxu0 0.0
        %929 = vmatpush1.msra.mxu0 0.0
        %930 = vmatprep.subr.mxu0 0.0
        %931 = vmatpush1.msra.mxu0 %v821
        %932 = vmatprep.subr.mxu0 0.0
        %933 = vmatpush2.msra.mxu0 0.0
        %934 = vmatprep.subr.mxu0 0.0
        %935 = vmatpush2.msra.mxu0 0.0
        %936 = vmatprep.subr.mxu0 0.0
        %937 = vmatpush2.msra.mxu0 0.0
        %938 = vmatprep.subr.mxu0 0.0
        %939 = vmatpush2.msra.mxu0 0.0
        %940 = vmatprep.subr.mxu0 0.0
        %941 = vmatpush2.msra.mxu0 0.0
        %942 = vmatprep.subr.mxu0 0.0
        %943 = vmatpush2.msra.mxu0 0.0
        %944 = vmatprep.subr.mxu0 0.0
        %945 = vmatpush2.msra.mxu0 0.0
        %946 = vmatprep.subr.mxu0 0.0
        %947 = vmatpush2.msra.mxu0 0.0
        %948 = vmatprep.subr.mxu0 0.0
        %949 = vmatpush2.msra.mxu0 0.0
        %950 = vmatprep.subr.mxu0 0.0
        %951 = vmatpush2.msra.mxu0 0.0
        %952 = vmatprep.subr.mxu0 0.0
        %953 = vmatpush2.msra.mxu0 0.0
        %954 = vmatprep.subr.mxu0 0.0
        %955 = vmatpush2.msra.mxu0 0.0
        %956 = vmatprep.subr.mxu0 0.0
        %957 = vmatpush2.msra.mxu0 0.0
        %958 = vmatprep.subr.mxu0 0.0
        %959 = vmatpush2.msra.mxu0 0.0
        %960 = vmatprep.subr.mxu0 0.0
        %961 = vmatpush2.msra.mxu0 0.0
        %962 = vmatprep.subr.mxu0 0.0
        %963 = vmatpush2.msra.mxu0 0.0
        %964 = vmatprep.mubr.f32.mxu0 0.0
        %965 = vmatmul.mubr.f32.gmra.mxu0 %v898
        %v966 = vpop.f32.mrf.mxu0
        %v967 = vadd.f32 0.0, %v966
        %v968 = vpop.f32.mrf.mxu0
        %969 = vdwg.mxu0
        %v971 = vsel %vm394, %v760, 0
        %973 = vmatprep.subr.mxu0 0.0
        %974 = vmatpush1.msra.mxu0 0.0
        %975 = vmatprep.subr.mxu0 0.0
        %976 = vmatpush1.msra.mxu0 0.0
        %977 = vmatprep.subr.mxu0 0.0
        %978 = vmatpush1.msra.mxu0 0.0
        %979 = vmatprep.subr.mxu0 0.0
        %980 = vmatpush1.msra.mxu0 0.0
        %981 = vmatprep.subr.mxu0 0.0
        %982 = vmatpush1.msra.mxu0 0.0
        %983 = vmatprep.subr.mxu0 0.0
        %984 = vmatpush1.msra.mxu0 0.0
        %985 = vmatprep.subr.mxu0 0.0
        %986 = vmatpush1.msra.mxu0 0.0
        %987 = vmatprep.subr.mxu0 0.0
        %988 = vmatpush1.msra.mxu0 0.0
        %989 = vmatprep.subr.mxu0 0.0
        %990 = vmatpush1.msra.mxu0 0.0
        %991 = vmatprep.subr.mxu0 0.0
        %992 = vmatpush1.msra.mxu0 0.0
        %993 = vmatprep.subr.mxu0 0.0
        %994 = vmatpush1.msra.mxu0 0.0
        %995 = vmatprep.subr.mxu0 0.0
        %996 = vmatpush1.msra.mxu0 0.0
        %997 = vmatprep.subr.mxu0 0.0
        %998 = vmatpush1.msra.mxu0 0.0
        %999 = vmatprep.subr.mxu0 0.0
        %1000 = vmatpush1.msra.mxu0 0.0
        %1001 = vmatprep.subr.mxu0 0.0
        %1002 = vmatpush1.msra.mxu0 0.0
        %1003 = vmatprep.subr.mxu0 0.0
        %1004 = vmatpush1.msra.mxu0 %v822
        %1005 = vmatprep.subr.mxu0 0.0
        %1006 = vmatpush2.msra.mxu0 0.0
        %1007 = vmatprep.subr.mxu0 0.0
        %1008 = vmatpush2.msra.mxu0 0.0
        %1009 = vmatprep.subr.mxu0 0.0
        %1010 = vmatpush2.msra.mxu0 0.0
        %1011 = vmatprep.subr.mxu0 0.0
        %1012 = vmatpush2.msra.mxu0 0.0
        %1013 = vmatprep.subr.mxu0 0.0
        %1014 = vmatpush2.msra.mxu0 0.0
        %1015 = vmatprep.subr.mxu0 0.0
        %1016 = vmatpush2.msra.mxu0 0.0
        %1017 = vmatprep.subr.mxu0 0.0
        %1018 = vmatpush2.msra.mxu0 0.0
        %1019 = vmatprep.subr.mxu0 0.0
        %1020 = vmatpush2.msra.mxu0 0.0
        %1021 = vmatprep.subr.mxu0 0.0
        %1022 = vmatpush2.msra.mxu0 0.0
        %1023 = vmatprep.subr.mxu0 0.0
        %1024 = vmatpush2.msra.mxu0 0.0
        %1025 = vmatprep.subr.mxu0 0.0
        %1026 = vmatpush2.msra.mxu0 0.0
        %1027 = vmatprep.subr.mxu0 0.0
        %1028 = vmatpush2.msra.mxu0 0.0
        %1029 = vmatprep.subr.mxu0 0.0
        %1030 = vmatpush2.msra.mxu0 0.0
        %1031 = vmatprep.subr.mxu0 0.0
        %1032 = vmatpush2.msra.mxu0 0.0
        %1033 = vmatprep.subr.mxu0 0.0
        %1034 = vmatpush2.msra.mxu0 0.0
        %1035 = vmatprep.subr.mxu0 0.0
        %1036 = vmatpush2.msra.mxu0 0.0
        %1037 = vmatprep.mubr.f32.mxu0 0.0
        %1038 = vmatmul.mubr.f32.gmra.mxu0 %v971
        %v1039 = vpop.f32.mrf.mxu0
        %v1040 = vadd.f32 0.0, %v1039
        %v1041 = vpop.f32.mrf.mxu0
        %1042 = vdwg.mxu0
        %v1044 = vsel %vm394, %v762, 0
        %1046 = vmatprep.subr.mxu0 0.0
        %1047 = vmatpush1.msra.mxu0 0.0
        %1048 = vmatprep.subr.mxu0 0.0
        %1049 = vmatpush1.msra.mxu0 0.0
        %1050 = vmatprep.subr.mxu0 0.0
        %1051 = vmatpush1.msra.mxu0 0.0
        %1052 = vmatprep.subr.mxu0 0.0
        %1053 = vmatpush1.msra.mxu0 0.0
        %1054 = vmatprep.subr.mxu0 0.0
        %1055 = vmatpush1.msra.mxu0 0.0
        %1056 = vmatprep.subr.mxu0 0.0
        %1057 = vmatpush1.msra.mxu0 0.0
        %1058 = vmatprep.subr.mxu0 0.0
        %1059 = vmatpush1.msra.mxu0 0.0
        %1060 = vmatprep.subr.mxu0 0.0
        %1061 = vmatpush1.msra.mxu0 0.0
        %1062 = vmatprep.subr.mxu0 0.0
        %1063 = vmatpush1.msra.mxu0 0.0
        %1064 = vmatprep.subr.mxu0 0.0
        %1065 = vmatpush1.msra.mxu0 0.0
        %1066 = vmatprep.subr.mxu0 0.0
        %1067 = vmatpush1.msra.mxu0 0.0
        %1068 = vmatprep.subr.mxu0 0.0
        %1069 = vmatpush1.msra.mxu0 0.0
        %1070 = vmatprep.subr.mxu0 0.0
        %1071 = vmatpush1.msra.mxu0 0.0
        %1072 = vmatprep.subr.mxu0 0.0
        %1073 = vmatpush1.msra.mxu0 0.0
        %1074 = vmatprep.subr.mxu0 0.0
        %1075 = vmatpush1.msra.mxu0 0.0
        %1076 = vmatprep.subr.mxu0 0.0
        %1077 = vmatpush1.msra.mxu0 %v823
        %1078 = vmatprep.subr.mxu0 0.0
        %1079 = vmatpush2.msra.mxu0 0.0
        %1080 = vmatprep.subr.mxu0 0.0
        %1081 = vmatpush2.msra.mxu0 0.0
        %1082 = vmatprep.subr.mxu0 0.0
        %1083 = vmatpush2.msra.mxu0 0.0
        %1084 = vmatprep.subr.mxu0 0.0
        %1085 = vmatpush2.msra.mxu0 0.0
        %1086 = vmatprep.subr.mxu0 0.0
        %1087 = vmatpush2.msra.mxu0 0.0
        %1088 = vmatprep.subr.mxu0 0.0
        %1089 = vmatpush2.msra.mxu0 0.0
        %1090 = vmatprep.subr.mxu0 0.0
        %1091 = vmatpush2.msra.mxu0 0.0
        %1092 = vmatprep.subr.mxu0 0.0
        %1093 = vmatpush2.msra.mxu0 0.0
        %1094 = vmatprep.subr.mxu0 0.0
        %1095 = vmatpush2.msra.mxu0 0.0
        %1096 = vmatprep.subr.mxu0 0.0
        %1097 = vmatpush2.msra.mxu0 0.0
        %1098 = vmatprep.subr.mxu0 0.0
        %1099 = vmatpush2.msra.mxu0 0.0
        %1100 = vmatprep.subr.mxu0 0.0
        %1101 = vmatpush2.msra.mxu0 0.0
        %1102 = vmatprep.subr.mxu0 0.0
        %1103 = vmatpush2.msra.mxu0 0.0
        %1104 = vmatprep.subr.mxu0 0.0
        %1105 = vmatpush2.msra.mxu0 0.0
        %1106 = vmatprep.subr.mxu0 0.0
        %1107 = vmatpush2.msra.mxu0 0.0
        %1108 = vmatprep.subr.mxu0 0.0
        %1109 = vmatpush2.msra.mxu0 0.0
        %1110 = vmatprep.mubr.f32.mxu0 0.0
        %1111 = vmatmul.mubr.f32.gmra.mxu0 %v1044
        %v1112 = vpop.f32.mrf.mxu0
        %v1113 = vadd.f32 0.0, %v1112
        %v1114 = vpop.f32.mrf.mxu0
        %1115 = vdwg.mxu0
        %v1116 = vadd.f32 %v816, %v894
        %v1117 = vadd.f32 %v817, %v967
        %v1118 = vadd.f32 %v818, %v1040
        %v1119 = vadd.f32 %v819, %v1113
        %1120 = vst.msk [vmem:[#allocation4] sm:$0xff] %vm394, %v1116
        %1121 = vst.msk [vmem:[#allocation4 + $0x8] sm:$0xff] %vm394, %v1117
        %1122 = vst.msk [vmem:[#allocation4 + $0x10] sm:$0xff] %vm394, %v1118
        %1123 = vst.msk [vmem:[#allocation4 + $0x18] sm:$0xff] %vm394, %v1119
        %1124 = vst.msk [vmem:[#allocation2] sm:$0xff] %vm787, %v715
        %1125 = vst.msk [vmem:[#allocation2 + $0x8] sm:$0xff] %vm787, %v716
        %1126 = vst.msk [vmem:[#allocation2 + $0x10] sm:$0xff] %vm787, %v717
        %1127 = vst.msk [vmem:[#allocation2 + $0x18] sm:$0xff] %vm787, %v718
        // Predicated region
        $region57: #{tpu_custom_call.1} parent=35 // pred_check
          %p1128 = pneg %p366
        $region58: #{tpu_custom_call.1} parent=35 // pred_check_branch
          %1130 = sbr.rel (%p1128) target = $region60
        $region59: #{tpu_custom_call.1} parent=35 // pred_region
          %v1131 = vld [vmem:[#allocation4] sm:$0xff]
          %v1132 = vld [vmem:[#allocation4 + $0x8] sm:$0xff]
          %v1133 = vld [vmem:[#allocation4 + $0x10] sm:$0xff]
          %v1134 = vld [vmem:[#allocation4 + $0x18] sm:$0xff]
          %v1135 = vld [vmem:[#allocation3] sm:$0xff]
          %v1136 = vld [vmem:[#allocation3 + $0x8] sm:$0xff]
          %v1137 = vld [vmem:[#allocation3 + $0x10] sm:$0xff]
          %v1138 = vld [vmem:[#allocation3 + $0x18] sm:$0xff]
          %v1139 = vrcp.pop %v1135
          %v1140 = vrcp.pop %v1136
          %v1141 = vrcp.pop %v1137
          %v1142 = vrcp.pop %v1138
          %1144 = vset.pattern.permute.xlu0 0
          %1145 = vperm.xlu0 %1144, %v1139
          %v1146 = vpop.permute.xlu0 %1145
          %1149 = vset.pattern.permute.xlu0 0
          %1150 = vperm.xlu0 %1149, %v1140
          %v1151 = vpop.permute.xlu0 %1150
          %1154 = vset.pattern.permute.xlu0 0
          %1155 = vperm.xlu0 %1154, %v1141
          %v1156 = vpop.permute.xlu0 %1155
          %1159 = vset.pattern.permute.xlu0 0
          %1160 = vperm.xlu0 %1159, %v1142
          %v1161 = vpop.permute.xlu0 %1160
          %v1163 = vmul.f32 %v1131, %v1146
          %v1164 = vmul.f32 %v1132, %v1151
          %v1165 = vmul.f32 %v1133, %v1156
          %v1166 = vmul.f32 %v1134, %v1161
          %1167 = vst.msk [vmem:[%s365] sm:$0xff] %vm394, %v1163
          %1169 = vrot.lane.b32.xlu0 %v1164, 8
          %v1170 = vpop.permute.xlu0 %1169
          %vm1172 = vcmask 130112
          %1173 = vst.msk [vmem:[%s365] sm:$0xff] %vm1172, %v1170
          %1175 = vrot.lane.b32.xlu0 %v1165, 16
          %v1176 = vpop.permute.xlu0 %1175
          %vm1178 = vcmask 195712
          %1179 = vst.msk [vmem:[%s365] sm:$0xff] %vm1178, %v1176
          %1181 = vrot.lane.b32.xlu0 %v1166, 24
          %v1182 = vpop.permute.xlu0 %1181
          %vm1184 = vcmask 261312
          %1185 = vst.msk [vmem:[%s365] sm:$0xff] %vm1184, %v1182
        $region60: #{tpu_custom_call.1} parent=35 // pred_fallthru
          _
        %s1186 = sand.u32 %s170, 1
        %s1187 = scalar_lea.sflag [#allocation7], %s1186
        %s1188 = sand.u32 %s170, 1
        %s1189 = smul.addr %s1188, 8
        %s1190 = scalar_lea.vmem [#allocation13], %s1189
        // Predicated region
        $region61: #{tpu_custom_call.1} parent=35 // pred_check
          %p1191 = pneg %p180
        $region62: #{tpu_custom_call.1} parent=35 // pred_check_branch
          %1193 = sbr.rel (%p1191) target = $region64
        $region63: #{tpu_custom_call.1} parent=35 // pred_region
          %s1195 = ssub.s32 128, 128
          %1196 = vsyncadd %s1187, %s1195
          %s1197 = sadd.s32 %s33, %s32
          %s1198 = smul.addr %s1197, 128
          %s1199 = scalar_lea.hbm %s4, %s1198
          %s1201 = sshll.u32 %s1190, 4
          %s1202 = int_to_ptr.vmem [resolvable:$true] %s1201
          %1204 = dma.vmem_to_hbm [thread:$0]  %s1202, 128, %s1199, %s1187
        $region64: #{tpu_custom_call.1} parent=35 // pred_fallthru
          _
      $region36: #{tpu_custom_call.1} parent=5 // pred_fallthru
        _
      %p1205 = scmp.le.s32.totalorder 2, %s22
      // Predicated region
      $region65: #{tpu_custom_call.1} parent=5 // pred_check
        %p1206 = pneg %p1205
      $region66: #{tpu_custom_call.1} parent=5 // pred_check_branch
        %1208 = sbr.rel (%p1206) target = $region68
      $region67: #{tpu_custom_call.1} parent=5 // pred_region
        %s1209 = ssub.s32 %s22, 2
        // Predicated region
        $region69: #{tpu_custom_call.1} parent=67 // pred_check
          %p1210 = pneg %p186
        $region70: #{tpu_custom_call.1} parent=67 // pred_check_branch
          %1212 = sbr.rel (%p1210) target = $region72
        $region71: #{tpu_custom_call.1} parent=67 // pred_region
          %s1213 = sand.u32 %s171, 1
          %s1214 = scalar_lea.sflag [#allocation7], %s1213
          %s1215 = sand.u32 %s171, 1
          %s1216 = smul.addr %s1215, 8
          %s1217 = scalar_lea.vmem [#allocation13], %s1216
          %1218 = dma.done %s1214, 128
        $region72: #{tpu_custom_call.1} parent=67 // pred_fallthru
          _
      $region68: #{tpu_custom_call.1} parent=5 // pred_fallthru
        _
    $region6: #{tpu_custom_call.1} parent=1 // loop_footer
      %s26 = sadd.s32 1, %s22
    $region7: #{tpu_custom_call.1} parent=1 // loop_footer_branch
      %21 = sbr.rel target = $region3
    $region8: #{tpu_custom_call.1} parent=1 // loop_exit
      _
    %1219 = vsyncpa [#allocation6], 1
    %s1220 = scalar_lea.sflag [#allocation6], 1
    %1221 = vsyncpa %s1220, 1
    %1222 = vsyncpa [#allocation9], 1
    %s1223 = scalar_lea.sflag [#allocation9], 1
    %1224 = vsyncpa %s1223, 1
    %1225 = vsyncpa [#allocation12], 1
    %s1226 = scalar_lea.sflag [#allocation12], 1
    %1227 = vsyncpa %s1226, 1
    %1228 = vsyncpa [#allocation7], 1
    %s1229 = scalar_lea.sflag [#allocation7], 1
    %1230 = vsyncpa %s1229, 1

</llo_original>
